<compile_context>
chip_gen: v7x
topology: tpu7x:2x2x1
jax: 0.10.0
libtpu: 0.0.40
codegen_flags: <defaults>
</compile_context>

<pallas_src>
import functools

import jax
import jax.numpy as jnp
from jax import lax
from jax.experimental import pallas as pl
from jax.experimental.pallas import tpu as pltpu

LANE = 128       # last-dim (lane) tiling unit
ROW_TILE = 16    # second-minor (sublane) tile; 16 is safe for bf16-packed blocks


def _round_up(n, m):
  return ((n + m - 1) // m) * m


def _pad2d(x, rows, cols):
  return jnp.pad(x, ((0, rows - x.shape[0]), (0, cols - x.shape[1])))


# ---------------------------------------------------------------------------
# Kernel 1: neighbor projection  proj_src = x_src @ W_neigh  (bf16, f32 accum).
# Hoisted out of the per-dst-tile loop: computed once per (layer, relation).
# ---------------------------------------------------------------------------
def _project_kernel(x_ref, w_ref, o_ref):
  o_ref[...] = jnp.dot(x_ref[...], w_ref[...],
                       preferred_element_type=jnp.float32).astype(o_ref.dtype)


def project_src(x_src, w_neigh, *, tile_m=ROW_TILE):
  n_src, f_in = x_src.shape
  f_out = w_neigh.shape[1]
  return pl.pallas_call(
      _project_kernel,
      out_shape=jax.ShapeDtypeStruct((n_src, f_out), jnp.bfloat16),
      grid=(n_src // tile_m,),
      in_specs=[
          pl.BlockSpec((tile_m, f_in), lambda i: (i, 0)),
          pl.BlockSpec((f_in, f_out), lambda i: (0, 0)),   # weights stay resident
      ],
      out_specs=pl.BlockSpec((tile_m, f_out), lambda i: (i, 0)),
      compiler_params=pltpu.CompilerParams(dimension_semantics=("parallel",)),
  )(x_src, w_neigh)


# ---------------------------------------------------------------------------
# Kernel 2: SAGE 'mean' aggregation + self path + bias (+ReLU), tiled over dst.
#   transpose_adj=False : adj rows are dst   (relation 'attempts')
#   transpose_adj=True  : adj cols are dst   (relation 'attempted_by'); the
#                         contraction runs over adj axis 0 so adj.T is never
#                         materialized in HBM.
# ---------------------------------------------------------------------------
def _sage_aggregate_kernel(adj_ref, proj_ref, xdst_ref, ws_ref, b_ref, o_ref,
                           *, transpose_adj, apply_relu):
  adj = adj_ref[...]                                   # bf16, exactly 0/1
  dims = ((((0,), (0,)), ((), ())) if transpose_adj
          else (((1,), (0,)), ((), ())))
  # Sum of projected neighbor features (MXU, f32 accumulation).
  h = lax.dot_general(adj, proj_ref[...], dims,
                      preferred_element_type=jnp.float32)      # (tile_m, Fout)
  # In-degree per dst node via adj @ 1 on the MXU (exact: 0/1 values, f32 acc).
  ones = jnp.ones((proj_ref.shape[0], 1), adj.dtype)
  deg = lax.dot_general(adj, ones, dims,
                        preferred_element_type=jnp.float32)    # (tile_m, 1)
  # mean = sum * 1/deg; approximate reciprocal runs on the EUP (~free slot).
  inv_deg = pl.reciprocal(jnp.maximum(deg, 1.0), approx=True)
  out = h * inv_deg
  out = out + jnp.dot(xdst_ref[...], ws_ref[...],
                      preferred_element_type=jnp.float32)
  out = out + b_ref[...]                                       # f32 bias
  if apply_relu:
    out = jnp.maximum(out, 0.0)
  o_ref[...] = out.astype(o_ref.dtype)                         # single downcast


def sage_aggregate(adj, proj_src, x_dst, w_self, bias, *, transpose_adj,
                   apply_relu, out_dtype, tile_m):
  n_src = proj_src.shape[0]
  n_dst = adj.shape[1] if transpose_adj else adj.shape[0]
  f_in = x_dst.shape[1]
  f_out = w_self.shape[1]
  if transpose_adj:
    adj_spec = pl.BlockSpec((n_src, tile_m), lambda i: (0, i))  # dst = columns
  else:
    adj_spec = pl.BlockSpec((tile_m, n_src), lambda i: (i, 0))  # dst = rows
  kernel = functools.partial(_sage_aggregate_kernel,
                             transpose_adj=transpose_adj,
                             apply_relu=apply_relu)
  return pl.pallas_call(
      kernel,
      out_shape=jax.ShapeDtypeStruct((n_dst, f_out), out_dtype),
      grid=(n_dst // tile_m,),
      in_specs=[
          adj_spec,
          pl.BlockSpec((n_src, f_out), lambda i: (0, 0)),  # projected src (resident)
          pl.BlockSpec((tile_m, f_in), lambda i: (i, 0)),  # dst feature tile
          pl.BlockSpec((f_in, f_out), lambda i: (0, 0)),   # W_self (resident)
          pl.BlockSpec((1, f_out), lambda i: (0, 0)),      # bias (resident)
      ],
      out_specs=pl.BlockSpec((tile_m, f_out), lambda i: (i, 0)),
      compiler_params=pltpu.CompilerParams(dimension_semantics=("parallel",)),
  )(adj, proj_src, x_dst, w_self, bias)


# ---------------------------------------------------------------------------
# Parameters and forward pass
# ---------------------------------------------------------------------------
def init_sage_params(key, in_feats, out_feats):
  kn, ks = jax.random.split(key)
  scale = 1.0 / jnp.sqrt(jnp.float32(in_feats))
  return {
      "w_neigh": jax.random.uniform(kn, (in_feats, out_feats), jnp.float32,
                                    -scale, scale),
      "w_self": jax.random.uniform(ks, (in_feats, out_feats), jnp.float32,
                                   -scale, scale),
      "bias": jnp.zeros((out_feats,), jnp.float32),
  }


def _prep_params(p):
  """Pad weights to (128,128)-aligned tiles; weights in bf16, bias in f32."""
  f_in, f_out = p["w_neigh"].shape
  fi, fo = _round_up(f_in, LANE), _round_up(f_out, LANE)
  return {
      "w_neigh": _pad2d(p["w_neigh"], fi, fo).astype(jnp.bfloat16),
      "w_self": _pad2d(p["w_self"], fi, fo).astype(jnp.bfloat16),
      "bias": _pad2d(p["bias"].reshape(1, -1), 1, fo),           # f32
  }


def graphsage_forward(params, adj_attempts, x_student, x_problem):
  """Two-layer hetero GraphSAGE.  adj_attempts: (N_problem, N_student)."""
  n_problem, n_student = adj_attempts.shape
  in_feats = x_student.shape[1]
  emb = params["conv2_attempts"]["w_neigh"].shape[1]

  # Padded layout: problems live on the adjacency sublane axis (pad to 16),
  # students on the lane axis (pad to 128) so dst-column tiles are lane-dense.
  np_pad = _round_up(n_problem, ROW_TILE)
  ns_pad = _round_up(n_student, LANE)
  fi_pad = _round_up(in_feats, LANE)

  adj = _pad2d(adj_attempts, np_pad, ns_pad).astype(jnp.bfloat16)   # exact 0/1
  xs = _pad2d(x_student, ns_pad, fi_pad).astype(jnp.bfloat16)
  xp = _pad2d(x_problem, np_pad, fi_pad).astype(jnp.bfloat16)

  pp = {k: _prep_params(v) for k, v in params.items()}

  def layer(p_att, p_aby, h_stud, h_prob, relu, out_dtype):
    # 'attempts': student (src) -> problem (dst); adj rows are the dst nodes.
    proj_s = project_src(h_stud, p_att["w_neigh"])
    out_prob = sage_aggregate(adj, proj_s, h_prob, p_att["w_self"],
                              p_att["bias"], transpose_adj=False,
                              apply_relu=relu, out_dtype=out_dtype,
                              tile_m=ROW_TILE)
    # 'attempted_by': problem (src) -> student (dst); adj cols are the dst
    # nodes -- handled in-kernel via dot_general (no HBM transpose of adj).
    proj_p = project_src(h_prob, p_aby["w_neigh"])
    out_stud = sage_aggregate(adj, proj_p, h_stud, p_aby["w_self"],
                              p_aby["bias"], transpose_adj=True,
                              apply_relu=relu, out_dtype=out_dtype,
                              tile_m=LANE)
    return out_stud, out_prob

  h_stud, h_prob = layer(pp["conv1_attempts"], pp["conv1_attempted_by"],
                         xs, xp, relu=True, out_dtype=jnp.bfloat16)
  o_stud, o_prob = layer(pp["conv2_attempts"], pp["conv2_attempted_by"],
                         h_stud, h_prob, relu=False, out_dtype=jnp.float32)

  return {"student": o_stud[:n_student, :emb],
          "problem": o_prob[:n_problem, :emb]}


# ---------------------------------------------------------------------------
# Pure-JAX f32 reference (exact mean) for a loose bf16-tolerance check.
# ---------------------------------------------------------------------------
def _sage_ref(adj, x_src, x_dst, p, relu):
  deg = jnp.maximum(jnp.sum(adj, axis=1, keepdims=True), 1.0)
  h_neigh = (adj @ x_src) / deg
  out = h_neigh @ p["w_neigh"] + x_dst @ p["w_self"] + p["bias"]
  return jnp.maximum(out, 0.0) if relu else out


def _graphsage_ref(params, adj, x_student, x_problem):
  h_prob = _sage_ref(adj, x_student, x_problem, params["conv1_attempts"], True)
  h_stud = _sage_ref(adj.T, x_problem, x_student, params["conv1_attempted_by"], True)
  o_prob = _sage_ref(adj, h_stud, h_prob, params["conv2_attempts"], False)
  o_stud = _sage_ref(adj.T, h_prob, h_stud, params["conv2_attempted_by"], False)
  return {"student": o_stud, "problem": o_prob}


if __name__ == "__main__":
  in_feats, h_feats, embedding_size = 32, 32, 16
  n_student, n_problem = 12, 16

  key = jax.random.PRNGKey(0)
  k_adj, k_xs, k_xp, k1, k2, k3, k4 = jax.random.split(key, 7)

  # Deterministic bipartite graph (student -> problem 'attempts' edges).
  adj_attempts = (jax.random.uniform(k_adj, (n_problem, n_student)) < 0.3
                  ).astype(jnp.float32)
  x_student = jax.random.normal(k_xs, (n_student, in_feats), jnp.float32)
  x_problem = jax.random.normal(k_xp, (n_problem, in_feats), jnp.float32)

  params = {
      "conv1_attempts": init_sage_params(k1, in_feats, h_feats),
      "conv1_attempted_by": init_sage_params(k2, in_feats, h_feats),
      "conv2_attempts": init_sage_params(k3, h_feats, embedding_size),
      "conv2_attempted_by": init_sage_params(k4, h_feats, embedding_size),
  }

  out = jax.jit(graphsage_forward)(params, adj_attempts, x_student, x_problem)
  jax.block_until_ready(out)

  assert out["student"].shape == (n_student, embedding_size)
  assert out["problem"].shape == (n_problem, embedding_size)

  ref = _graphsage_ref(params, adj_attempts, x_student, x_problem)
  err = max(float(jnp.max(jnp.abs(out["student"] - ref["student"]))),
            float(jnp.max(jnp.abs(out["problem"] - ref["problem"]))))
  assert err < 0.25, f"max abs error vs f32 reference too large: {err}"
  print("KERNEL_OK")
</pallas_src>

<mosaic_0001>
module attributes {stable_mosaic.version = 11 : i64} {
  func.func @_sage_aggregate_kernel(%arg0: i32, %arg1: memref<16x128xbf16, #tpu.memory_space<vmem>>, %arg2: memref<128x128xbf16, #tpu.memory_space<vmem>>, %arg3: memref<16x128xbf16, #tpu.memory_space<vmem>>, %arg4: memref<128x128xbf16, #tpu.memory_space<vmem>>, %arg5: memref<1x128xf32, #tpu.memory_space<vmem>>, %arg6: memref<16x128xbf16, #tpu.memory_space<vmem>>) attributes {dimension_semantics = [#tpu.dimension_semantics<parallel>], iteration_bounds = array<i64: 1>, scalar_prefetch = 0 : i64, scratch_operands = 0 : i64, tpu.core_type = #tpu.core_type<tc>, window_params = [{transform_indices = @transform_0, window_bounds = array<i64: 16, 128>}, {pipeline_mode = #tpu.pipeline_mode<synchronous>, transform_indices = @transform_1, window_bounds = array<i64: 128, 128>}, {transform_indices = @transform_2, window_bounds = array<i64: 16, 128>}, {pipeline_mode = #tpu.pipeline_mode<synchronous>, transform_indices = @transform_3, window_bounds = array<i64: 128, 128>}, {pipeline_mode = #tpu.pipeline_mode<synchronous>, transform_indices = @transform_4, window_bounds = array<i64: 1, 128>}, {transform_indices = @transform_5, window_bounds = array<i64: 16, 128>}]} {
    %c0 = arith.constant 0 : index
    %c0_0 = arith.constant 0 : index
    %0 = vector.load %arg1[%c0, %c0_0] : memref<16x128xbf16, #tpu.memory_space<vmem>>, vector<16x128xbf16>
    %c0_1 = arith.constant 0 : index
    %c0_2 = arith.constant 0 : index
    %1 = vector.load %arg2[%c0_1, %c0_2] : memref<128x128xbf16, #tpu.memory_space<vmem>>, vector<128x128xbf16>
    %cst = arith.constant dense<0.000000e+00> : vector<16x128xf32>
    %2 = tpu.matmul %0, %1, %cst {dimension_numbers = #tpu.dot_dimension_numbers<[1], [0], [0], [1], [0, 0, 1, 1], [], []>} : vector<16x128xbf16>, vector<128x128xbf16>, vector<16x128xf32> -> vector<16x128xf32>
    %cst_3 = arith.constant 1.000000e+00 : bf16
    %3 = vector.broadcast %cst_3 : bf16 to vector<128x1xbf16>
    %cst_4 = arith.constant dense<0.000000e+00> : vector<16x1xf32>
    %4 = tpu.matmul %0, %3, %cst_4 {dimension_numbers = #tpu.dot_dimension_numbers<[1], [0], [0], [1], [0, 0, 1, 1], [], []>} : vector<16x128xbf16>, vector<128x1xbf16>, vector<16x1xf32> -> vector<16x1xf32>
    %cst_5 = arith.constant 1.000000e+00 : f32
    %5 = vector.broadcast %cst_5 : f32 to vector<16x1xf32>
    %6 = arith.maximumf %4, %5 : vector<16x1xf32>
    %7 = tpu.reciprocal %6 {approx = true} : vector<16x1xf32> -> vector<16x1xf32>
    %8 = vector.broadcast %7 : vector<16x1xf32> to vector<16x128xf32>
    %9 = arith.mulf %2, %8 : vector<16x128xf32>
    %c0_6 = arith.constant 0 : index
    %c0_7 = arith.constant 0 : index
    %10 = vector.load %arg3[%c0_6, %c0_7] : memref<16x128xbf16, #tpu.memory_space<vmem>>, vector<16x128xbf16>
    %c0_8 = arith.constant 0 : index
    %c0_9 = arith.constant 0 : index
    %11 = vector.load %arg4[%c0_8, %c0_9] : memref<128x128xbf16, #tpu.memory_space<vmem>>, vector<128x128xbf16>
    %cst_10 = arith.constant dense<0.000000e+00> : vector<16x128xf32>
    %12 = tpu.matmul %10, %11, %cst_10 {dimension_numbers = #tpu.dot_dimension_numbers<[1], [0], [0], [1], [0, 0, 1, 1], [], []>} : vector<16x128xbf16>, vector<128x128xbf16>, vector<16x128xf32> -> vector<16x128xf32>
    %13 = arith.addf %9, %12 : vector<16x128xf32>
    %c0_11 = arith.constant 0 : index
    %c0_12 = arith.constant 0 : index
    %14 = vector.load %arg5[%c0_11, %c0_12] : memref<1x128xf32, #tpu.memory_space<vmem>>, vector<1x128xf32>
    %15 = vector.broadcast %14 : vector<1x128xf32> to vector<16x128xf32>
    %16 = arith.addf %13, %15 : vector<16x128xf32>
    %cst_13 = arith.constant 0.000000e+00 : f32
    %17 = vector.broadcast %cst_13 : f32 to vector<16x128xf32>
    %18 = arith.maximumf %16, %17 : vector<16x128xf32>
    %19 = arith.truncf %18 : vector<16x128xf32> to vector<16x128xbf16>
    %c0_14 = arith.constant 0 : index
    %c0_15 = arith.constant 0 : index
    %20 = vector.load %arg6[%c0_14, %c0_15] : memref<16x128xbf16, #tpu.memory_space<vmem>>, vector<16x128xbf16>
    tpu.vector_store %arg6[%c0_14, %c0_15], %19 {strides = array<i32>} : memref<16x128xbf16, #tpu.memory_space<vmem>>, vector<16x128xbf16>,
    return
  }
  func.func @transform_0(%arg0: i32) -> (i32, i32) {
    %c0_i32 = arith.constant 0 : i32
    %c0_i32_0 = arith.constant 0 : i32
    return %arg0, %c0_i32 : i32, i32
  }
  func.func @transform_1(%arg0: i32) -> (i32, i32) {
    %c0_i32 = arith.constant 0 : i32
    %c0_i32_0 = arith.constant 0 : i32
    %c0_i32_1 = arith.constant 0 : i32
    return %c0_i32, %c0_i32_0 : i32, i32
  }
  func.func @transform_2(%arg0: i32) -> (i32, i32) {
    %c0_i32 = arith.constant 0 : i32
    %c0_i32_0 = arith.constant 0 : i32
    return %arg0, %c0_i32 : i32, i32
  }
  func.func @transform_3(%arg0: i32) -> (i32, i32) {
    %c0_i32 = arith.constant 0 : i32
    %c0_i32_0 = arith.constant 0 : i32
    %c0_i32_1 = arith.constant 0 : i32
    return %c0_i32, %c0_i32_0 : i32, i32
  }
  func.func @transform_4(%arg0: i32) -> (i32, i32) {
    %c0_i32 = arith.constant 0 : i32
    %c0_i32_0 = arith.constant 0 : i32
    %c0_i32_1 = arith.constant 0 : i32
    return %c0_i32, %c0_i32_0 : i32, i32
  }
  func.func @transform_5(%arg0: i32) -> (i32, i32) {
    %c0_i32 = arith.constant 0 : i32
    %c0_i32_0 = arith.constant 0 : i32
    return %arg0, %c0_i32 : i32, i32
  }
}

module attributes {stable_mosaic.version = 11 : i64} {
  func.func @_project_kernel(%arg0: i32, %arg1: memref<16x128xbf16, #tpu.memory_space<vmem>>, %arg2: memref<128x128xbf16, #tpu.memory_space<vmem>>, %arg3: memref<16x128xbf16, #tpu.memory_space<vmem>>) attributes {dimension_semantics = [#tpu.dimension_semantics<parallel>], iteration_bounds = array<i64: 8>, scalar_prefetch = 0 : i64, scratch_operands = 0 : i64, tpu.core_type = #tpu.core_type<tc>, window_params = [{transform_indices = @transform_0, window_bounds = array<i64: 16, 128>}, {pipeline_mode = #tpu.pipeline_mode<synchronous>, transform_indices = @transform_1, window_bounds = array<i64: 128, 128>}, {transform_indices = @transform_2, window_bounds = array<i64: 16, 128>}]} {
    %c0 = arith.constant 0 : index
    %c0_0 = arith.constant 0 : index
    %0 = vector.load %arg1[%c0, %c0_0] : memref<16x128xbf16, #tpu.memory_space<vmem>>, vector<16x128xbf16>
    %c0_1 = arith.constant 0 : index
    %c0_2 = arith.constant 0 : index
    %1 = vector.load %arg2[%c0_1, %c0_2] : memref<128x128xbf16, #tpu.memory_space<vmem>>, vector<128x128xbf16>
    %cst = arith.constant dense<0.000000e+00> : vector<16x128xf32>
    %2 = tpu.matmul %0, %1, %cst {dimension_numbers = #tpu.dot_dimension_numbers<[1], [0], [0], [1], [0, 0, 1, 1], [], []>} : vector<16x128xbf16>, vector<128x128xbf16>, vector<16x128xf32> -> vector<16x128xf32>
    %3 = arith.truncf %2 : vector<16x128xf32> to vector<16x128xbf16>
    %c0_3 = arith.constant 0 : index
    %c0_4 = arith.constant 0 : index
    %4 = vector.load %arg3[%c0_3, %c0_4] : memref<16x128xbf16, #tpu.memory_space<vmem>>, vector<16x128xbf16>
    tpu.vector_store %arg3[%c0_3, %c0_4], %3 {strides = array<i32>} : memref<16x128xbf16, #tpu.memory_space<vmem>>, vector<16x128xbf16>,
    return
  }
  func.func @transform_0(%arg0: i32) -> (i32, i32) {
    %c0_i32 = arith.constant 0 : i32
    %c0_i32_0 = arith.constant 0 : i32
    return %arg0, %c0_i32 : i32, i32
  }
  func.func @transform_1(%arg0: i32) -> (i32, i32) {
    %c0_i32 = arith.constant 0 : i32
    %c0_i32_0 = arith.constant 0 : i32
    %c0_i32_1 = arith.constant 0 : i32
    return %c0_i32, %c0_i32_0 : i32, i32
  }
  func.func @transform_2(%arg0: i32) -> (i32, i32) {
    %c0_i32 = arith.constant 0 : i32
    %c0_i32_0 = arith.constant 0 : i32
    return %arg0, %c0_i32 : i32, i32
  }
}

module attributes {stable_mosaic.version = 11 : i64} {
  func.func @_project_kernel(%arg0: i32, %arg1: memref<16x128xbf16, #tpu.memory_space<vmem>>, %arg2: memref<128x128xbf16, #tpu.memory_space<vmem>>, %arg3: memref<16x128xbf16, #tpu.memory_space<vmem>>) attributes {dimension_semantics = [#tpu.dimension_semantics<parallel>], iteration_bounds = array<i64: 1>, scalar_prefetch = 0 : i64, scratch_operands = 0 : i64, tpu.core_type = #tpu.core_type<tc>, window_params = [{transform_indices = @transform_0, window_bounds = array<i64: 16, 128>}, {pipeline_mode = #tpu.pipeline_mode<synchronous>, transform_indices = @transform_1, window_bounds = array<i64: 128, 128>}, {transform_indices = @transform_2, window_bounds = array<i64: 16, 128>}]} {
    %c0 = arith.constant 0 : index
    %c0_0 = arith.constant 0 : index
    %0 = vector.load %arg1[%c0, %c0_0] : memref<16x128xbf16, #tpu.memory_space<vmem>>, vector<16x128xbf16>
    %c0_1 = arith.constant 0 : index
    %c0_2 = arith.constant 0 : index
    %1 = vector.load %arg2[%c0_1, %c0_2] : memref<128x128xbf16, #tpu.memory_space<vmem>>, vector<128x128xbf16>
    %cst = arith.constant dense<0.000000e+00> : vector<16x128xf32>
    %2 = tpu.matmul %0, %1, %cst {dimension_numbers = #tpu.dot_dimension_numbers<[1], [0], [0], [1], [0, 0, 1, 1], [], []>} : vector<16x128xbf16>, vector<128x128xbf16>, vector<16x128xf32> -> vector<16x128xf32>
    %3 = arith.truncf %2 : vector<16x128xf32> to vector<16x128xbf16>
    %c0_3 = arith.constant 0 : index
    %c0_4 = arith.constant 0 : index
    %4 = vector.load %arg3[%c0_3, %c0_4] : memref<16x128xbf16, #tpu.memory_space<vmem>>, vector<16x128xbf16>
    tpu.vector_store %arg3[%c0_3, %c0_4], %3 {strides = array<i32>} : memref<16x128xbf16, #tpu.memory_space<vmem>>, vector<16x128xbf16>,
    return
  }
  func.func @transform_0(%arg0: i32) -> (i32, i32) {
    %c0_i32 = arith.constant 0 : i32
    %c0_i32_0 = arith.constant 0 : i32
    return %arg0, %c0_i32 : i32, i32
  }
  func.func @transform_1(%arg0: i32) -> (i32, i32) {
    %c0_i32 = arith.constant 0 : i32
    %c0_i32_0 = arith.constant 0 : i32
    %c0_i32_1 = arith.constant 0 : i32
    return %c0_i32, %c0_i32_0 : i32, i32
  }
  func.func @transform_2(%arg0: i32) -> (i32, i32) {
    %c0_i32 = arith.constant 0 : i32
    %c0_i32_0 = arith.constant 0 : i32
    return %arg0, %c0_i32 : i32, i32
  }
}

module attributes {stable_mosaic.version = 11 : i64} {
  func.func @_sage_aggregate_kernel(%arg0: i32, %arg1: memref<16x128xbf16, #tpu.memory_space<vmem>>, %arg2: memref<16x128xbf16, #tpu.memory_space<vmem>>, %arg3: memref<128x128xbf16, #tpu.memory_space<vmem>>, %arg4: memref<128x128xbf16, #tpu.memory_space<vmem>>, %arg5: memref<1x128xf32, #tpu.memory_space<vmem>>, %arg6: memref<128x128xbf16, #tpu.memory_space<vmem>>) attributes {dimension_semantics = [#tpu.dimension_semantics<parallel>], iteration_bounds = array<i64: 1>, scalar_prefetch = 0 : i64, scratch_operands = 0 : i64, tpu.core_type = #tpu.core_type<tc>, window_params = [{transform_indices = @transform_0, window_bounds = array<i64: 16, 128>}, {pipeline_mode = #tpu.pipeline_mode<synchronous>, transform_indices = @transform_1, window_bounds = array<i64: 16, 128>}, {transform_indices = @transform_2, window_bounds = array<i64: 128, 128>}, {pipeline_mode = #tpu.pipeline_mode<synchronous>, transform_indices = @transform_3, window_bounds = array<i64: 128, 128>}, {pipeline_mode = #tpu.pipeline_mode<synchronous>, transform_indices = @transform_4, window_bounds = array<i64: 1, 128>}, {transform_indices = @transform_5, window_bounds = array<i64: 128, 128>}]} {
    %c0 = arith.constant 0 : index
    %c0_0 = arith.constant 0 : index
    %0 = vector.load %arg1[%c0, %c0_0] : memref<16x128xbf16, #tpu.memory_space<vmem>>, vector<16x128xbf16>
    %c0_1 = arith.constant 0 : index
    %c0_2 = arith.constant 0 : index
    %1 = vector.load %arg2[%c0_1, %c0_2] : memref<16x128xbf16, #tpu.memory_space<vmem>>, vector<16x128xbf16>
    %cst = arith.constant dense<0.000000e+00> : vector<128x128xf32>
    %2 = tpu.matmul %0, %1, %cst {dimension_numbers = #tpu.dot_dimension_numbers<[0], [0], [1], [1], [0, 1, 1, 1], [], []>} : vector<16x128xbf16>, vector<16x128xbf16>, vector<128x128xf32> -> vector<128x128xf32>
    %cst_3 = arith.constant 1.000000e+00 : bf16
    %3 = vector.broadcast %cst_3 : bf16 to vector<16x1xbf16>
    %cst_4 = arith.constant dense<0.000000e+00> : vector<128x1xf32>
    %4 = tpu.matmul %0, %3, %cst_4 {dimension_numbers = #tpu.dot_dimension_numbers<[0], [0], [1], [1], [0, 1, 1, 1], [], []>} : vector<16x128xbf16>, vector<16x1xbf16>, vector<128x1xf32> -> vector<128x1xf32>
    %cst_5 = arith.constant 1.000000e+00 : f32
    %5 = vector.broadcast %cst_5 : f32 to vector<128x1xf32>
    %6 = arith.maximumf %4, %5 : vector<128x1xf32>
    %7 = tpu.reciprocal %6 {approx = true} : vector<128x1xf32> -> vector<128x1xf32>
    %8 = vector.broadcast %7 : vector<128x1xf32> to vector<128x128xf32>
    %9 = arith.mulf %2, %8 : vector<128x128xf32>
    %c0_6 = arith.constant 0 : index
    %c0_7 = arith.constant 0 : index
    %10 = vector.load %arg3[%c0_6, %c0_7] : memref<128x128xbf16, #tpu.memory_space<vmem>>, vector<128x128xbf16>
    %c0_8 = arith.constant 0 : index
    %c0_9 = arith.constant 0 : index
    %11 = vector.load %arg4[%c0_8, %c0_9] : memref<128x128xbf16, #tpu.memory_space<vmem>>, vector<128x128xbf16>
    %cst_10 = arith.constant dense<0.000000e+00> : vector<128x128xf32>
    %12 = tpu.matmul %10, %11, %cst_10 {dimension_numbers = #tpu.dot_dimension_numbers<[1], [0], [0], [1], [0, 0, 1, 1], [], []>} : vector<128x128xbf16>, vector<128x128xbf16>, vector<128x128xf32> -> vector<128x128xf32>
    %13 = arith.addf %9, %12 : vector<128x128xf32>
    %c0_11 = arith.constant 0 : index
    %c0_12 = arith.constant 0 : index
    %14 = vector.load %arg5[%c0_11, %c0_12] : memref<1x128xf32, #tpu.memory_space<vmem>>, vector<1x128xf32>
    %15 = vector.broadcast %14 : vector<1x128xf32> to vector<128x128xf32>
    %16 = arith.addf %13, %15 : vector<128x128xf32>
    %cst_13 = arith.constant 0.000000e+00 : f32
    %17 = vector.broadcast %cst_13 : f32 to vector<128x128xf32>
    %18 = arith.maximumf %16, %17 : vector<128x128xf32>
    %19 = arith.truncf %18 : vector<128x128xf32> to vector<128x128xbf16>
    %c0_14 = arith.constant 0 : index
    %c0_15 = arith.constant 0 : index
    %20 = vector.load %arg6[%c0_14, %c0_15] : memref<128x128xbf16, #tpu.memory_space<vmem>>, vector<128x128xbf16>
    tpu.vector_store %arg6[%c0_14, %c0_15], %19 {strides = array<i32>} : memref<128x128xbf16, #tpu.memory_space<vmem>>, vector<128x128xbf16>,
    return
  }
  func.func @transform_0(%arg0: i32) -> (i32, i32) {
    %c0_i32 = arith.constant 0 : i32
    %c0_i32_0 = arith.constant 0 : i32
    return %c0_i32, %arg0 : i32, i32
  }
  func.func @transform_1(%arg0: i32) -> (i32, i32) {
    %c0_i32 = arith.constant 0 : i32
    %c0_i32_0 = arith.constant 0 : i32
    %c0_i32_1 = arith.constant 0 : i32
    return %c0_i32, %c0_i32_0 : i32, i32
  }
  func.func @transform_2(%arg0: i32) -> (i32, i32) {
    %c0_i32 = arith.constant 0 : i32
    %c0_i32_0 = arith.constant 0 : i32
    return %arg0, %c0_i32 : i32, i32
  }
  func.func @transform_3(%arg0: i32) -> (i32, i32) {
    %c0_i32 = arith.constant 0 : i32
    %c0_i32_0 = arith.constant 0 : i32
    %c0_i32_1 = arith.constant 0 : i32
    return %c0_i32, %c0_i32_0 : i32, i32
  }
  func.func @transform_4(%arg0: i32) -> (i32, i32) {
    %c0_i32 = arith.constant 0 : i32
    %c0_i32_0 = arith.constant 0 : i32
    %c0_i32_1 = arith.constant 0 : i32
    return %c0_i32, %c0_i32_0 : i32, i32
  }
  func.func @transform_5(%arg0: i32) -> (i32, i32) {
    %c0_i32 = arith.constant 0 : i32
    %c0_i32_0 = arith.constant 0 : i32
    return %arg0, %c0_i32 : i32, i32
  }
}

module attributes {stable_mosaic.version = 11 : i64} {
  func.func @_sage_aggregate_kernel(%arg0: i32, %arg1: memref<16x128xbf16, #tpu.memory_space<vmem>>, %arg2: memref<16x128xbf16, #tpu.memory_space<vmem>>, %arg3: memref<128x128xbf16, #tpu.memory_space<vmem>>, %arg4: memref<128x128xbf16, #tpu.memory_space<vmem>>, %arg5: memref<1x128xf32, #tpu.memory_space<vmem>>, %arg6: memref<128x128xf32, #tpu.memory_space<vmem>>) attributes {dimension_semantics = [#tpu.dimension_semantics<parallel>], iteration_bounds = array<i64: 1>, scalar_prefetch = 0 : i64, scratch_operands = 0 : i64, tpu.core_type = #tpu.core_type<tc>, window_params = [{transform_indices = @transform_0, window_bounds = array<i64: 16, 128>}, {pipeline_mode = #tpu.pipeline_mode<synchronous>, transform_indices = @transform_1, window_bounds = array<i64: 16, 128>}, {transform_indices = @transform_2, window_bounds = array<i64: 128, 128>}, {pipeline_mode = #tpu.pipeline_mode<synchronous>, transform_indices = @transform_3, window_bounds = array<i64: 128, 128>}, {pipeline_mode = #tpu.pipeline_mode<synchronous>, transform_indices = @transform_4, window_bounds = array<i64: 1, 128>}, {transform_indices = @transform_5, window_bounds = array<i64: 128, 128>}]} {
    %c0 = arith.constant 0 : index
    %c0_0 = arith.constant 0 : index
    %0 = vector.load %arg1[%c0, %c0_0] : memref<16x128xbf16, #tpu.memory_space<vmem>>, vector<16x128xbf16>
    %c0_1 = arith.constant 0 : index
    %c0_2 = arith.constant 0 : index
    %1 = vector.load %arg2[%c0_1, %c0_2] : memref<16x128xbf16, #tpu.memory_space<vmem>>, vector<16x128xbf16>
    %cst = arith.constant dense<0.000000e+00> : vector<128x128xf32>
    %2 = tpu.matmul %0, %1, %cst {dimension_numbers = #tpu.dot_dimension_numbers<[0], [0], [1], [1], [0, 1, 1, 1], [], []>} : vector<16x128xbf16>, vector<16x128xbf16>, vector<128x128xf32> -> vector<128x128xf32>
    %cst_3 = arith.constant 1.000000e+00 : bf16
    %3 = vector.broadcast %cst_3 : bf16 to vector<16x1xbf16>
    %cst_4 = arith.constant dense<0.000000e+00> : vector<128x1xf32>
    %4 = tpu.matmul %0, %3, %cst_4 {dimension_numbers = #tpu.dot_dimension_numbers<[0], [0], [1], [1], [0, 1, 1, 1], [], []>} : vector<16x128xbf16>, vector<16x1xbf16>, vector<128x1xf32> -> vector<128x1xf32>
    %cst_5 = arith.constant 1.000000e+00 : f32
    %5 = vector.broadcast %cst_5 : f32 to vector<128x1xf32>
    %6 = arith.maximumf %4, %5 : vector<128x1xf32>
    %7 = tpu.reciprocal %6 {approx = true} : vector<128x1xf32> -> vector<128x1xf32>
    %8 = vector.broadcast %7 : vector<128x1xf32> to vector<128x128xf32>
    %9 = arith.mulf %2, %8 : vector<128x128xf32>
    %c0_6 = arith.constant 0 : index
    %c0_7 = arith.constant 0 : index
    %10 = vector.load %arg3[%c0_6, %c0_7] : memref<128x128xbf16, #tpu.memory_space<vmem>>, vector<128x128xbf16>
    %c0_8 = arith.constant 0 : index
    %c0_9 = arith.constant 0 : index
    %11 = vector.load %arg4[%c0_8, %c0_9] : memref<128x128xbf16, #tpu.memory_space<vmem>>, vector<128x128xbf16>
    %cst_10 = arith.constant dense<0.000000e+00> : vector<128x128xf32>
    %12 = tpu.matmul %10, %11, %cst_10 {dimension_numbers = #tpu.dot_dimension_numbers<[1], [0], [0], [1], [0, 0, 1, 1], [], []>} : vector<128x128xbf16>, vector<128x128xbf16>, vector<128x128xf32> -> vector<128x128xf32>
    %13 = arith.addf %9, %12 : vector<128x128xf32>
    %c0_11 = arith.constant 0 : index
    %c0_12 = arith.constant 0 : index
    %14 = vector.load %arg5[%c0_11, %c0_12] : memref<1x128xf32, #tpu.memory_space<vmem>>, vector<1x128xf32>
    %15 = vector.broadcast %14 : vector<1x128xf32> to vector<128x128xf32>
    %16 = arith.addf %13, %15 : vector<128x128xf32>
    %c0_13 = arith.constant 0 : index
    %c0_14 = arith.constant 0 : index
    %17 = vector.load %arg6[%c0_13, %c0_14] : memref<128x128xf32, #tpu.memory_space<vmem>>, vector<128x128xf32>
    tpu.vector_store %arg6[%c0_13, %c0_14], %16 {strides = array<i32>} : memref<128x128xf32, #tpu.memory_space<vmem>>, vector<128x128xf32>,
    return
  }
  func.func @transform_0(%arg0: i32) -> (i32, i32) {
    %c0_i32 = arith.constant 0 : i32
    %c0_i32_0 = arith.constant 0 : i32
    return %c0_i32, %arg0 : i32, i32
  }
  func.func @transform_1(%arg0: i32) -> (i32, i32) {
    %c0_i32 = arith.constant 0 : i32
    %c0_i32_0 = arith.constant 0 : i32
    %c0_i32_1 = arith.constant 0 : i32
    return %c0_i32, %c0_i32_0 : i32, i32
  }
  func.func @transform_2(%arg0: i32) -> (i32, i32) {
    %c0_i32 = arith.constant 0 : i32
    %c0_i32_0 = arith.constant 0 : i32
    return %arg0, %c0_i32 : i32, i32
  }
  func.func @transform_3(%arg0: i32) -> (i32, i32) {
    %c0_i32 = arith.constant 0 : i32
    %c0_i32_0 = arith.constant 0 : i32
    %c0_i32_1 = arith.constant 0 : i32
    return %c0_i32, %c0_i32_0 : i32, i32
  }
  func.func @transform_4(%arg0: i32) -> (i32, i32) {
    %c0_i32 = arith.constant 0 : i32
    %c0_i32_0 = arith.constant 0 : i32
    %c0_i32_1 = arith.constant 0 : i32
    return %c0_i32, %c0_i32_0 : i32, i32
  }
  func.func @transform_5(%arg0: i32) -> (i32, i32) {
    %c0_i32 = arith.constant 0 : i32
    %c0_i32_0 = arith.constant 0 : i32
    return %arg0, %c0_i32 : i32, i32
  }
}

module attributes {stable_mosaic.version = 11 : i64} {
  func.func @_sage_aggregate_kernel(%arg0: i32, %arg1: memref<16x128xbf16, #tpu.memory_space<vmem>>, %arg2: memref<128x128xbf16, #tpu.memory_space<vmem>>, %arg3: memref<16x128xbf16, #tpu.memory_space<vmem>>, %arg4: memref<128x128xbf16, #tpu.memory_space<vmem>>, %arg5: memref<1x128xf32, #tpu.memory_space<vmem>>, %arg6: memref<16x128xf32, #tpu.memory_space<vmem>>) attributes {dimension_semantics = [#tpu.dimension_semantics<parallel>], iteration_bounds = array<i64: 1>, scalar_prefetch = 0 : i64, scratch_operands = 0 : i64, tpu.core_type = #tpu.core_type<tc>, window_params = [{transform_indices = @transform_0, window_bounds = array<i64: 16, 128>}, {pipeline_mode = #tpu.pipeline_mode<synchronous>, transform_indices = @transform_1, window_bounds = array<i64: 128, 128>}, {transform_indices = @transform_2, window_bounds = array<i64: 16, 128>}, {pipeline_mode = #tpu.pipeline_mode<synchronous>, transform_indices = @transform_3, window_bounds = array<i64: 128, 128>}, {pipeline_mode = #tpu.pipeline_mode<synchronous>, transform_indices = @transform_4, window_bounds = array<i64: 1, 128>}, {transform_indices = @transform_5, window_bounds = array<i64: 16, 128>}]} {
    %c0 = arith.constant 0 : index
    %c0_0 = arith.constant 0 : index
    %0 = vector.load %arg1[%c0, %c0_0] : memref<16x128xbf16, #tpu.memory_space<vmem>>, vector<16x128xbf16>
    %c0_1 = arith.constant 0 : index
    %c0_2 = arith.constant 0 : index
    %1 = vector.load %arg2[%c0_1, %c0_2] : memref<128x128xbf16, #tpu.memory_space<vmem>>, vector<128x128xbf16>
    %cst = arith.constant dense<0.000000e+00> : vector<16x128xf32>
    %2 = tpu.matmul %0, %1, %cst {dimension_numbers = #tpu.dot_dimension_numbers<[1], [0], [0], [1], [0, 0, 1, 1], [], []>} : vector<16x128xbf16>, vector<128x128xbf16>, vector<16x128xf32> -> vector<16x128xf32>
    %cst_3 = arith.constant 1.000000e+00 : bf16
    %3 = vector.broadcast %cst_3 : bf16 to vector<128x1xbf16>
    %cst_4 = arith.constant dense<0.000000e+00> : vector<16x1xf32>
    %4 = tpu.matmul %0, %3, %cst_4 {dimension_numbers = #tpu.dot_dimension_numbers<[1], [0], [0], [1], [0, 0, 1, 1], [], []>} : vector<16x128xbf16>, vector<128x1xbf16>, vector<16x1xf32> -> vector<16x1xf32>
    %cst_5 = arith.constant 1.000000e+00 : f32
    %5 = vector.broadcast %cst_5 : f32 to vector<16x1xf32>
    %6 = arith.maximumf %4, %5 : vector<16x1xf32>
    %7 = tpu.reciprocal %6 {approx = true} : vector<16x1xf32> -> vector<16x1xf32>
    %8 = vector.broadcast %7 : vector<16x1xf32> to vector<16x128xf32>
    %9 = arith.mulf %2, %8 : vector<16x128xf32>
    %c0_6 = arith.constant 0 : index
    %c0_7 = arith.constant 0 : index
    %10 = vector.load %arg3[%c0_6, %c0_7] : memref<16x128xbf16, #tpu.memory_space<vmem>>, vector<16x128xbf16>
    %c0_8 = arith.constant 0 : index
    %c0_9 = arith.constant 0 : index
    %11 = vector.load %arg4[%c0_8, %c0_9] : memref<128x128xbf16, #tpu.memory_space<vmem>>, vector<128x128xbf16>
    %cst_10 = arith.constant dense<0.000000e+00> : vector<16x128xf32>
    %12 = tpu.matmul %10, %11, %cst_10 {dimension_numbers = #tpu.dot_dimension_numbers<[1], [0], [0], [1], [0, 0, 1, 1], [], []>} : vector<16x128xbf16>, vector<128x128xbf16>, vector<16x128xf32> -> vector<16x128xf32>
    %13 = arith.addf %9, %12 : vector<16x128xf32>
    %c0_11 = arith.constant 0 : index
    %c0_12 = arith.constant 0 : index
    %14 = vector.load %arg5[%c0_11, %c0_12] : memref<1x128xf32, #tpu.memory_space<vmem>>, vector<1x128xf32>
    %15 = vector.broadcast %14 : vector<1x128xf32> to vector<16x128xf32>
    %16 = arith.addf %13, %15 : vector<16x128xf32>
    %c0_13 = arith.constant 0 : index
    %c0_14 = arith.constant 0 : index
    %17 = vector.load %arg6[%c0_13, %c0_14] : memref<16x128xf32, #tpu.memory_space<vmem>>, vector<16x128xf32>
    tpu.vector_store %arg6[%c0_13, %c0_14], %16 {strides = array<i32>} : memref<16x128xf32, #tpu.memory_space<vmem>>, vector<16x128xf32>,
    return
  }
  func.func @transform_0(%arg0: i32) -> (i32, i32) {
    %c0_i32 = arith.constant 0 : i32
    %c0_i32_0 = arith.constant 0 : i32
    return %arg0, %c0_i32 : i32, i32
  }
  func.func @transform_1(%arg0: i32) -> (i32, i32) {
    %c0_i32 = arith.constant 0 : i32
    %c0_i32_0 = arith.constant 0 : i32
    %c0_i32_1 = arith.constant 0 : i32
    return %c0_i32, %c0_i32_0 : i32, i32
  }
  func.func @transform_2(%arg0: i32) -> (i32, i32) {
    %c0_i32 = arith.constant 0 : i32
    %c0_i32_0 = arith.constant 0 : i32
    return %arg0, %c0_i32 : i32, i32
  }
  func.func @transform_3(%arg0: i32) -> (i32, i32) {
    %c0_i32 = arith.constant 0 : i32
    %c0_i32_0 = arith.constant 0 : i32
    %c0_i32_1 = arith.constant 0 : i32
    return %c0_i32, %c0_i32_0 : i32, i32
  }
  func.func @transform_4(%arg0: i32) -> (i32, i32) {
    %c0_i32 = arith.constant 0 : i32
    %c0_i32_0 = arith.constant 0 : i32
    %c0_i32_1 = arith.constant 0 : i32
    return %c0_i32, %c0_i32_0 : i32, i32
  }
  func.func @transform_5(%arg0: i32) -> (i32, i32) {
    %c0_i32 = arith.constant 0 : i32
    %c0_i32_0 = arith.constant 0 : i32
    return %arg0, %c0_i32 : i32, i32
  }
}

</mosaic_0001>

<llo_original>
// kernel: graphsage_forward.14
$region0: #{graphsage_forward.14}
  #allocation0 [shape = 'u32[]', space=smem, size = 0x4, offset = 0x4, fixed_abs, tag = 'smem constant byte address 0x4 - core index']
  #allocation1 [shape = 'u32[144,128]{1,0:T(1,128)}', space=vmem, size = 0x12000, scoped, tag = 'internal scratch']
  %s0 = inlined_call_operand.vmem [shape: bf16[16,128], index: 0, kind: input, shape index: {}]
  %s1 = inlined_call_operand.vmem [shape: bf16[128,128], index: 1, kind: input, shape index: {}]
  %s2 = inlined_call_operand.vmem [shape: bf16[16,128], index: 2, kind: output, shape index: {}]
  %s3 = sld [smem:[#allocation0]]
  $region18: #{graphsage_forward.14} parent=0
    _
  %s5 = ssub.s32 1, %s3
  %s6 = scalar_select 0, %s5, %s3
  // Predicated region
  $region2: #{graphsage_forward.14} parent=0 // pred_check
    _
  $region3: #{graphsage_forward.14} parent=0 // pred_check_branch
    %8 = sbr.rel (0) target = $region5
  $region4: #{graphsage_forward.14} parent=0 // pred_region
    _
  $region5: #{graphsage_forward.14} parent=0 // pred_fallthru
    _
  // Predicated region
  $region6: #{graphsage_forward.14} parent=0 // pred_check
    _
  $region7: #{graphsage_forward.14} parent=0 // pred_check_branch
    %10 = sbr.rel (0) target = $region9
  $region8: #{graphsage_forward.14} parent=0 // pred_region
    _
  $region9: #{graphsage_forward.14} parent=0 // pred_fallthru
    _
  %v12 = vld [vmem:[%s0] sm:$0xf]
  %v13 = vld [vmem:[%s0 + $0x4] sm:$0xf]
  %v14 = vld [vmem:[%s1] sm:$0xf]
  %v15 = vld [vmem:[%s1 + $0x4] sm:$0xf]
  %v16 = vld [vmem:[%s1 + $0x8] sm:$0xf]
  %v17 = vld [vmem:[%s1 + $0xc] sm:$0xf]
  %v18 = vld [vmem:[%s1 + $0x10] sm:$0xf]
  %v19 = vld [vmem:[%s1 + $0x14] sm:$0xf]
  %v20 = vld [vmem:[%s1 + $0x18] sm:$0xf]
  %v21 = vld [vmem:[%s1 + $0x1c] sm:$0xf]
  %v22 = vld [vmem:[%s1 + $0x20] sm:$0xf]
  %v23 = vld [vmem:[%s1 + $0x24] sm:$0xf]
  %v24 = vld [vmem:[%s1 + $0x28] sm:$0xf]
  %v25 = vld [vmem:[%s1 + $0x2c] sm:$0xf]
  %v26 = vld [vmem:[%s1 + $0x30] sm:$0xf]
  %v27 = vld [vmem:[%s1 + $0x34] sm:$0xf]
  %v28 = vld [vmem:[%s1 + $0x38] sm:$0xf]
  %v29 = vld [vmem:[%s1 + $0x3c] sm:$0xf]
  %v32 = vunpack.c.l.b16 %v12
  %v33 = vunpack.c.l.b16 %v13
  %v34 = vpack.c.b16 %v33, %v32
  %v52 = vunpack.c.l.b16 %v14
  %v53 = vunpack.c.l.b16 %v15
  %v54 = vunpack.c.l.b16 %v16
  %v55 = vunpack.c.l.b16 %v17
  %v56 = vunpack.c.l.b16 %v18
  %v57 = vunpack.c.l.b16 %v19
  %v58 = vunpack.c.l.b16 %v20
  %v59 = vunpack.c.l.b16 %v21
  %v60 = vunpack.c.l.b16 %v22
  %v61 = vunpack.c.l.b16 %v23
  %v62 = vunpack.c.l.b16 %v24
  %v63 = vunpack.c.l.b16 %v25
  %v64 = vunpack.c.l.b16 %v26
  %v65 = vunpack.c.l.b16 %v27
  %v66 = vunpack.c.l.b16 %v28
  %v67 = vunpack.c.l.b16 %v29
  %v68 = vpack.c.b16 %v53, %v52
  %v69 = vpack.c.b16 %v55, %v54
  %v70 = vpack.c.b16 %v57, %v56
  %v71 = vpack.c.b16 %v59, %v58
  %v72 = vpack.c.b16 %v61, %v60
  %v73 = vpack.c.b16 %v63, %v62
  %v74 = vpack.c.b16 %v65, %v64
  %v75 = vpack.c.b16 %v67, %v66
  %84 = vmatprep.subr.bf16.mxu0 0
  %85 = vmatpush1.bf16.msra.mxu0 %v68
  %86 = vmatprep.subr.bf16.mxu0 0
  %87 = vmatpush1.bf16.msra.mxu0 %v69
  %88 = vmatprep.subr.bf16.mxu0 0
  %89 = vmatpush1.bf16.msra.mxu0 %v70
  %90 = vmatprep.subr.bf16.mxu0 0
  %91 = vmatpush1.bf16.msra.mxu0 %v71
  %92 = vmatprep.subr.bf16.mxu0 0
  %93 = vmatpush1.bf16.msra.mxu0 %v72
  %94 = vmatprep.subr.bf16.mxu0 0
  %95 = vmatpush1.bf16.msra.mxu0 %v73
  %96 = vmatprep.subr.bf16.mxu0 0
  %97 = vmatpush1.bf16.msra.mxu0 %v74
  %98 = vmatprep.subr.bf16.mxu0 0
  %99 = vmatpush1.bf16.msra.mxu0 %v75
  %100 = vmatprep.subr.bf16.mxu0 0
  %101 = vmatpush1.bf16.msra.mxu0 0
  %102 = vmatprep.subr.bf16.mxu0 0
  %103 = vmatpush1.bf16.msra.mxu0 0
  %104 = vmatprep.subr.bf16.mxu0 0
  %105 = vmatpush1.bf16.msra.mxu0 0
  %106 = vmatprep.subr.bf16.mxu0 0
  %107 = vmatpush1.bf16.msra.mxu0 0
  %108 = vmatprep.subr.bf16.mxu0 0
  %109 = vmatpush1.bf16.msra.mxu0 0
  %110 = vmatprep.subr.bf16.mxu0 0
  %111 = vmatpush1.bf16.msra.mxu0 0
  %112 = vmatprep.subr.bf16.mxu0 0
  %113 = vmatpush1.bf16.msra.mxu0 0
  %114 = vmatprep.subr.bf16.mxu0 0
  %115 = vmatpush1.bf16.msra.mxu0 0
  %116 = vmatprep.mubr.bf16.mxu0 0
  %117 = vmatmul.mubr.bf16.gmra.mrb[0].mxu0 %v34
  %v118 = vpop.f32.mrb[0].mxu0
  %v119 = vadd.f32 0.0, %v118
  %v120 = vpop.f32.mrb[0].mxu0
  %v121 = vpop.f32.mrb[0].mxu0
  %v122 = vadd.f32 0.0, %v121
  %v123 = vpop.f32.mrb[0].mxu0
  %124 = vdwg.mxu0
  %v125 = vpack.c.bf16 %v122, %v119
  %v127 = vunpack.c.l.b16 %v125
  %v128 = vunpack.c.h.b16 %v125
  %v129 = vpack.c.b16 %v127, %v127
  %v130 = vpack.c.b16 %v128, %v128
  %133 = vst [vmem:[%s2] sm:$0xf] %v129
  %134 = vst [vmem:[%s2 + $0x4] sm:$0xf] %v130
  // Predicated region
  $region10: #{graphsage_forward.14} parent=0 // pred_check
    _
  $region11: #{graphsage_forward.14} parent=0 // pred_check_branch
    %136 = sbr.rel (0) target = $region13
  $region12: #{graphsage_forward.14} parent=0 // pred_region
    _
  $region13: #{graphsage_forward.14} parent=0 // pred_fallthru
    _
  // Predicated region
  $region14: #{graphsage_forward.14} parent=0 // pred_check
    _
  $region15: #{graphsage_forward.14} parent=0 // pred_check_branch
    %138 = sbr.rel (0) target = $region17
  $region16: #{graphsage_forward.14} parent=0 // pred_region
    _
  $region17: #{graphsage_forward.14} parent=0 // pred_fallthru
    _

// kernel: graphsage_forward.8
$region0: #{graphsage_forward.8}
  #allocation0 [shape = 'u32[]', space=smem, size = 0x4, offset = 0x4, fixed_abs, tag = 'smem constant byte address 0x4 - core index']
  #allocation1 [shape = 'u32[144,128]{1,0:T(1,128)}', space=vmem, size = 0x12000, scoped, tag = 'internal scratch']
  %s0 = inlined_call_operand.vmem [shape: bf16[128,128], index: 0, kind: input, shape index: {}]
  %s1 = inlined_call_operand.vmem [shape: bf16[128,128], index: 1, kind: input, shape index: {}]
  %s2 = inlined_call_operand.vmem [shape: bf16[128,128], index: 2, kind: output, shape index: {}]
  %s3 = sld [smem:[#allocation0]]
  $region41: #{graphsage_forward.8} parent=0
    _
  %s5 = ssub.s32 1, %s3
  %s6 = scalar_select 0, %s5, %s3
  loop: start=0, step=1, limit=10
  $region2: #{graphsage_forward.8} parent=0 // loop_pre_header
    _
  $region3: #{graphsage_forward.8} parent=0 // loop_header
    %s8 = sphi 0, %s12
    %p9 = scmp.ge.s32.totalorder %s8, 10
    %s18 = sphi 0, %s20
    %s21 = sphi 0, %s18
    %s22 = sphi 0, %s21
    %s38 = sphi 0, %s22
    %s42 = sphi 0, %s42
    %s44 = sphi 0, %s42
    %s45 = sphi 0, %s44
    %s59 = sphi 0, %s45
    %s65 = sphi 0, %s67
    %s68 = sphi 0, %s65
    %s69 = sphi 0, %s68
    %s85 = sphi 0, %s69
  $region4: #{graphsage_forward.8} parent=0 // loop_header_branch
    %11 = sbr.rel (%p9) target = $region8
  $region5: #{graphsage_forward.8} parent=0 // loop_body
    %s13 = ssub.s32 %s8, 1
    %s14 = ssub.s32 %s8, 2
    %s15 = sadd.s32 %s8, 1
    %s16 = ssub.s32 %s8, %s15
    %p17 = scmp.eq.s32.totalorder %s16, 0
    %s19 = sadd.s32 %s18, 1
    %s20 = scalar_select %p17, %s18, %s19
    %p23 = pneg %p17
    %p24 = scmp.eq.s32.totalorder %s8, 7
    %p25 = por %p23, %p24
    %p26 = scmp.ne.s32.totalorder %s18, %s21
    %p27 = scmp.eq.s32.totalorder %s8, 0
    %p28 = por %p26, %p27
    %p29 = scmp.ne.s32.totalorder %s18, %s21
    %p30 = scmp.eq.s32.totalorder %s13, 7
    %p31 = por %p29, %p30
    %p32 = scmp.ne.s32.totalorder %s21, %s22
    %p33 = scmp.eq.s32.totalorder %s13, 0
    %p34 = por %p32, %p33
    %p35 = scmp.ne.s32.totalorder %s21, %s22
    %p36 = scmp.eq.s32.totalorder %s14, 7
    %p37 = por %p35, %p36
    %p39 = scmp.ne.s32.totalorder %s22, %s38
    %p40 = scmp.eq.s32.totalorder %s14, 0
    %p41 = por %p39, %p40
    %s43 = sadd.s32 %s42, 1
    %p46 = scmp.eq.s32.totalorder %s8, 7
    %p47 = scmp.ne.s32.totalorder %s42, %s44
    %p48 = scmp.eq.s32.totalorder %s8, 0
    %p49 = por %p47, %p48
    %p50 = scmp.ne.s32.totalorder %s42, %s44
    %p51 = scmp.eq.s32.totalorder %s13, 7
    %p52 = por %p50, %p51
    %p53 = scmp.ne.s32.totalorder %s44, %s45
    %p54 = scmp.eq.s32.totalorder %s13, 0
    %p55 = por %p53, %p54
    %p56 = scmp.ne.s32.totalorder %s44, %s45
    %p57 = scmp.eq.s32.totalorder %s14, 7
    %p58 = por %p56, %p57
    %p60 = scmp.ne.s32.totalorder %s45, %s59
    %p61 = scmp.eq.s32.totalorder %s14, 0
    %p62 = por %p60, %p61
    %s63 = ssub.s32 %s8, %s15
    %p64 = scmp.eq.s32.totalorder %s63, 0
    %s66 = sadd.s32 %s65, 1
    %s67 = scalar_select %p64, %s65, %s66
    %p70 = pneg %p64
    %p71 = scmp.eq.s32.totalorder %s8, 7
    %p72 = por %p70, %p71
    %p73 = scmp.ne.s32.totalorder %s65, %s68
    %p74 = scmp.eq.s32.totalorder %s8, 0
    %p75 = por %p73, %p74
    %p76 = scmp.ne.s32.totalorder %s65, %s68
    %p77 = scmp.eq.s32.totalorder %s13, 7
    %p78 = por %p76, %p77
    %p79 = scmp.ne.s32.totalorder %s68, %s69
    %p80 = scmp.eq.s32.totalorder %s13, 0
    %p81 = por %p79, %p80
    %p82 = scmp.ne.s32.totalorder %s68, %s69
    %p83 = scmp.eq.s32.totalorder %s14, 7
    %p84 = por %p82, %p83
    %p86 = scmp.ne.s32.totalorder %s69, %s85
    %p87 = scmp.eq.s32.totalorder %s14, 0
    %p88 = por %p86, %p87
    %p89 = scmp.le.s32.totalorder 1, %s8
    %p90 = scmp.lt.s32.totalorder %s8, 9
    %p91 = pnand %p89, %p90
    %p92 = pneg %p91
    // Predicated region
    $region9: #{graphsage_forward.8} parent=5 // pred_check
      _
    $region10: #{graphsage_forward.8} parent=5 // pred_check_branch
      %94 = sbr.rel (%p91) target = $region12
    $region11: #{graphsage_forward.8} parent=5 // pred_region
      %s95 = ssub.s32 %s8, 1
      // Predicated region
      $region13: #{graphsage_forward.8} parent=11 // pred_check
        %p96 = pneg %p55
      $region14: #{graphsage_forward.8} parent=11 // pred_check_branch
        %98 = sbr.rel (%p96) target = $region16
      $region15: #{graphsage_forward.8} parent=11 // pred_region
        _
      $region16: #{graphsage_forward.8} parent=11 // pred_fallthru
        _
    $region12: #{graphsage_forward.8} parent=5 // pred_fallthru
      _
    %p99 = scmp.lt.s32.totalorder %s8, 8
    // Predicated region
    $region17: #{graphsage_forward.8} parent=5 // pred_check
      %p100 = pneg %p99
    $region18: #{graphsage_forward.8} parent=5 // pred_check_branch
      %102 = sbr.rel (%p100) target = $region20
    $region19: #{graphsage_forward.8} parent=5 // pred_region
      // Predicated region
      $region21: #{graphsage_forward.8} parent=19 // pred_check
        %p103 = pneg %p28
      $region22: #{graphsage_forward.8} parent=19 // pred_check_branch
        %105 = sbr.rel (%p103) target = $region24
      $region23: #{graphsage_forward.8} parent=19 // pred_region
        %s106 = smul.u32 2, %s8
        %p107 = scmp.lt.s32.totalorder %s106, 15
        %s108 = scalar_select %p107, %s106, 15
        %s109 = smul.addr %s108, 4
        %s110 = scalar_lea.vmem %s0, %s109
        %s111 = smul.u32 2, %s8
      $region24: #{graphsage_forward.8} parent=19 // pred_fallthru
        _
    $region20: #{graphsage_forward.8} parent=5 // pred_fallthru
      _
    %p112 = scmp.le.s32.totalorder 1, %s8
    %p113 = scmp.lt.s32.totalorder %s8, 9
    %p114 = pnand %p112, %p113
    %p115 = pneg %p114
    // Predicated region
    $region25: #{graphsage_forward.8} parent=5 // pred_check
      _
    $region26: #{graphsage_forward.8} parent=5 // pred_check_branch
      %117 = sbr.rel (%p114) target = $region28
    $region27: #{graphsage_forward.8} parent=5 // pred_region
      %s118 = ssub.s32 %s8, 1
      %s119 = smul.u32 2, %s13
      %p120 = scmp.lt.s32.totalorder %s119, 15
      %s121 = scalar_select %p120, %s119, 15
      %s122 = smul.addr %s121, 4
      %s123 = scalar_lea.vmem %s0, %s122
      %p124 = pneg %p34
      %p125 = pneg %p31
      %p126 = pneg %p55
      %p127 = pneg %p52
      %p128 = pneg %p81
      %p129 = pneg %p78
      %s130 = smul.u32 2, %s13
      %p131 = scmp.lt.s32.totalorder %s130, 15
      %s132 = scalar_select %p131, %s130, 15
      %s133 = smul.addr %s132, 4
      %s134 = scalar_lea.vmem %s2, %s133
      %s135 = smul.u32 2, %s13
      %p136 = scmp.lt.s32.totalorder %s135, 15
      %s137 = scalar_select %p136, %s135, 15
      %s138 = smul.addr %s137, 4
      %s139 = scalar_lea.vmem %s0, %s138
      %s140 = smul.u32 2, %s13
      %s141 = smul.u32 2, %s13
      %p142 = scmp.lt.s32.totalorder %s141, 15
      %s143 = scalar_select %p142, %s141, 15
      %s144 = smul.addr %s143, 4
      %s145 = scalar_lea.vmem %s2, %s144
      %s146 = smul.u32 2, %s13
      %v148 = vld [vmem:[%s139] sm:$0xf]
      %v149 = vld [vmem:[%s139 + $0x4] sm:$0xf]
      %v150 = vld [vmem:[%s1] sm:$0xf]
      %v151 = vld [vmem:[%s1 + $0x4] sm:$0xf]
      %v152 = vld [vmem:[%s1 + $0x8] sm:$0xf]
      %v153 = vld [vmem:[%s1 + $0xc] sm:$0xf]
      %v154 = vld [vmem:[%s1 + $0x10] sm:$0xf]
      %v155 = vld [vmem:[%s1 + $0x14] sm:$0xf]
      %v156 = vld [vmem:[%s1 + $0x18] sm:$0xf]
      %v157 = vld [vmem:[%s1 + $0x1c] sm:$0xf]
      %v158 = vld [vmem:[%s1 + $0x20] sm:$0xf]
      %v159 = vld [vmem:[%s1 + $0x24] sm:$0xf]
      %v160 = vld [vmem:[%s1 + $0x28] sm:$0xf]
      %v161 = vld [vmem:[%s1 + $0x2c] sm:$0xf]
      %v162 = vld [vmem:[%s1 + $0x30] sm:$0xf]
      %v163 = vld [vmem:[%s1 + $0x34] sm:$0xf]
      %v164 = vld [vmem:[%s1 + $0x38] sm:$0xf]
      %v165 = vld [vmem:[%s1 + $0x3c] sm:$0xf]
      %v168 = vunpack.c.l.b16 %v148
      %v169 = vunpack.c.l.b16 %v149
      %v170 = vpack.c.b16 %v169, %v168
      %v188 = vunpack.c.l.b16 %v150
      %v189 = vunpack.c.l.b16 %v151
      %v190 = vunpack.c.l.b16 %v152
      %v191 = vunpack.c.l.b16 %v153
      %v192 = vunpack.c.l.b16 %v154
      %v193 = vunpack.c.l.b16 %v155
      %v194 = vunpack.c.l.b16 %v156
      %v195 = vunpack.c.l.b16 %v157
      %v196 = vunpack.c.l.b16 %v158
      %v197 = vunpack.c.l.b16 %v159
      %v198 = vunpack.c.l.b16 %v160
      %v199 = vunpack.c.l.b16 %v161
      %v200 = vunpack.c.l.b16 %v162
      %v201 = vunpack.c.l.b16 %v163
      %v202 = vunpack.c.l.b16 %v164
      %v203 = vunpack.c.l.b16 %v165
      %v204 = vpack.c.b16 %v189, %v188
      %v205 = vpack.c.b16 %v191, %v190
      %v206 = vpack.c.b16 %v193, %v192
      %v207 = vpack.c.b16 %v195, %v194
      %v208 = vpack.c.b16 %v197, %v196
      %v209 = vpack.c.b16 %v199, %v198
      %v210 = vpack.c.b16 %v201, %v200
      %v211 = vpack.c.b16 %v203, %v202
      %220 = vmatprep.subr.bf16.mxu0 0
      %221 = vmatpush1.bf16.msra.mxu0 %v204
      %222 = vmatprep.subr.bf16.mxu0 0
      %223 = vmatpush1.bf16.msra.mxu0 %v205
      %224 = vmatprep.subr.bf16.mxu0 0
      %225 = vmatpush1.bf16.msra.mxu0 %v206
      %226 = vmatprep.subr.bf16.mxu0 0
      %227 = vmatpush1.bf16.msra.mxu0 %v207
      %228 = vmatprep.subr.bf16.mxu0 0
      %229 = vmatpush1.bf16.msra.mxu0 %v208
      %230 = vmatprep.subr.bf16.mxu0 0
      %231 = vmatpush1.bf16.msra.mxu0 %v209
      %232 = vmatprep.subr.bf16.mxu0 0
      %233 = vmatpush1.bf16.msra.mxu0 %v210
      %234 = vmatprep.subr.bf16.mxu0 0
      %235 = vmatpush1.bf16.msra.mxu0 %v211
      %236 = vmatprep.subr.bf16.mxu0 0
      %237 = vmatpush1.bf16.msra.mxu0 0
      %238 = vmatprep.subr.bf16.mxu0 0
      %239 = vmatpush1.bf16.msra.mxu0 0
      %240 = vmatprep.subr.bf16.mxu0 0
      %241 = vmatpush1.bf16.msra.mxu0 0
      %242 = vmatprep.subr.bf16.mxu0 0
      %243 = vmatpush1.bf16.msra.mxu0 0
      %244 = vmatprep.subr.bf16.mxu0 0
      %245 = vmatpush1.bf16.msra.mxu0 0
      %246 = vmatprep.subr.bf16.mxu0 0
      %247 = vmatpush1.bf16.msra.mxu0 0
      %248 = vmatprep.subr.bf16.mxu0 0
      %249 = vmatpush1.bf16.msra.mxu0 0
      %250 = vmatprep.subr.bf16.mxu0 0
      %251 = vmatpush1.bf16.msra.mxu0 0
      %252 = vmatprep.mubr.bf16.mxu0 0
      %253 = vmatmul.mubr.bf16.gmra.mrb[0].mxu0 %v170
      %v254 = vpop.f32.mrb[0].mxu0
      %v255 = vadd.f32 0.0, %v254
      %v256 = vpop.f32.mrb[0].mxu0
      %v257 = vpop.f32.mrb[0].mxu0
      %v258 = vadd.f32 0.0, %v257
      %v259 = vpop.f32.mrb[0].mxu0
      %260 = vdwg.mxu0
      %v261 = vpack.c.bf16 %v258, %v255
      %v263 = vunpack.c.l.b16 %v261
      %v264 = vunpack.c.h.b16 %v261
      %v265 = vpack.c.b16 %v263, %v263
      %v266 = vpack.c.b16 %v264, %v264
      %269 = vst [vmem:[%s145] sm:$0xf] %v265
      %270 = vst [vmem:[%s145 + $0x4] sm:$0xf] %v266
      %s271 = smul.u32 2, %s13
      %p272 = scmp.lt.s32.totalorder %s271, 15
      %s273 = scalar_select %p272, %s271, 15
      %s274 = smul.addr %s273, 4
      %s275 = scalar_lea.vmem %s2, %s274
      // Predicated region
      $region29: #{graphsage_forward.8} parent=27 // pred_check
        %p276 = pneg %p78
      $region30: #{graphsage_forward.8} parent=27 // pred_check_branch
        %278 = sbr.rel (%p276) target = $region32
      $region31: #{graphsage_forward.8} parent=27 // pred_region
        %s279 = smul.u32 2, %s13
      $region32: #{graphsage_forward.8} parent=27 // pred_fallthru
        _
    $region28: #{graphsage_forward.8} parent=5 // pred_fallthru
      _
    %p280 = scmp.le.s32.totalorder 2, %s8
    // Predicated region
    $region33: #{graphsage_forward.8} parent=5 // pred_check
      %p281 = pneg %p280
    $region34: #{graphsage_forward.8} parent=5 // pred_check_branch
      %283 = sbr.rel (%p281) target = $region36
    $region35: #{graphsage_forward.8} parent=5 // pred_region
      %s284 = ssub.s32 %s8, 2
      // Predicated region
      $region37: #{graphsage_forward.8} parent=35 // pred_check
        %p285 = pneg %p84
      $region38: #{graphsage_forward.8} parent=35 // pred_check_branch
        %287 = sbr.rel (%p285) target = $region40
      $region39: #{graphsage_forward.8} parent=35 // pred_region
        %s288 = smul.u32 2, %s14
        %p289 = scmp.lt.s32.totalorder %s288, 15
        %s290 = scalar_select %p289, %s288, 15
        %s291 = smul.addr %s290, 4
        %s292 = scalar_lea.vmem %s2, %s291
      $region40: #{graphsage_forward.8} parent=35 // pred_fallthru
        _
    $region36: #{graphsage_forward.8} parent=5 // pred_fallthru
      _
  $region6: #{graphsage_forward.8} parent=0 // loop_footer
    %s12 = sadd.s32 1, %s8
  $region7: #{graphsage_forward.8} parent=0 // loop_footer_branch
    %7 = sbr.rel target = $region3
  $region8: #{graphsage_forward.8} parent=0 // loop_exit
    _

// kernel: graphsage_forward.9
$region0: #{graphsage_forward.9}
  #allocation0 [shape = 'u32[]', space=smem, size = 0x4, offset = 0x4, fixed_abs, tag = 'smem constant byte address 0x4 - core index']
  #allocation1 [shape = 'u32[144,128]{1,0:T(1,128)}', space=vmem, size = 0x12000, scoped, tag = 'internal scratch']
  %s0 = inlined_call_operand.vmem [shape: bf16[16,128], index: 0, kind: input, shape index: {}]
  %s1 = inlined_call_operand.vmem [shape: bf16[128,128], index: 1, kind: input, shape index: {}]
  %s2 = inlined_call_operand.vmem [shape: bf16[16,128], index: 2, kind: input, shape index: {}]
  %s3 = inlined_call_operand.vmem [shape: bf16[128,128], index: 3, kind: input, shape index: {}]
  %s4 = inlined_call_operand.vmem [shape: f32[1,128], index: 4, kind: input, shape index: {}]
  %s5 = inlined_call_operand.vmem [shape: bf16[16,128], index: 5, kind: output, shape index: {}]
  %s6 = sld [smem:[#allocation0]]
  $region30: #{graphsage_forward.9} parent=0
    _
  %s8 = ssub.s32 1, %s6
  %s9 = scalar_select 0, %s8, %s6
  // Predicated region
  $region2: #{graphsage_forward.9} parent=0 // pred_check
    _
  $region3: #{graphsage_forward.9} parent=0 // pred_check_branch
    %11 = sbr.rel (0) target = $region5
  $region4: #{graphsage_forward.9} parent=0 // pred_region
    _
  $region5: #{graphsage_forward.9} parent=0 // pred_fallthru
    _
  // Predicated region
  $region6: #{graphsage_forward.9} parent=0 // pred_check
    _
  $region7: #{graphsage_forward.9} parent=0 // pred_check_branch
    %13 = sbr.rel (0) target = $region9
  $region8: #{graphsage_forward.9} parent=0 // pred_region
    _
  $region9: #{graphsage_forward.9} parent=0 // pred_fallthru
    _
  // Predicated region
  $region10: #{graphsage_forward.9} parent=0 // pred_check
    _
  $region11: #{graphsage_forward.9} parent=0 // pred_check_branch
    %15 = sbr.rel (0) target = $region13
  $region12: #{graphsage_forward.9} parent=0 // pred_region
    _
  $region13: #{graphsage_forward.9} parent=0 // pred_fallthru
    _
  // Predicated region
  $region14: #{graphsage_forward.9} parent=0 // pred_check
    _
  $region15: #{graphsage_forward.9} parent=0 // pred_check_branch
    %17 = sbr.rel (0) target = $region17
  $region16: #{graphsage_forward.9} parent=0 // pred_region
    _
  $region17: #{graphsage_forward.9} parent=0 // pred_fallthru
    _
  // Predicated region
  $region18: #{graphsage_forward.9} parent=0 // pred_check
    _
  $region19: #{graphsage_forward.9} parent=0 // pred_check_branch
    %19 = sbr.rel (0) target = $region21
  $region20: #{graphsage_forward.9} parent=0 // pred_region
    _
  $region21: #{graphsage_forward.9} parent=0 // pred_fallthru
    _
  %v22 = vld [vmem:[%s0] sm:$0xf]
  %v23 = vld [vmem:[%s0 + $0x4] sm:$0xf]
  %v24 = vld [vmem:[%s1] sm:$0xf]
  %v25 = vld [vmem:[%s1 + $0x4] sm:$0xf]
  %v26 = vld [vmem:[%s1 + $0x8] sm:$0xf]
  %v27 = vld [vmem:[%s1 + $0xc] sm:$0xf]
  %v28 = vld [vmem:[%s1 + $0x10] sm:$0xf]
  %v29 = vld [vmem:[%s1 + $0x14] sm:$0xf]
  %v30 = vld [vmem:[%s1 + $0x18] sm:$0xf]
  %v31 = vld [vmem:[%s1 + $0x1c] sm:$0xf]
  %v32 = vld [vmem:[%s1 + $0x20] sm:$0xf]
  %v33 = vld [vmem:[%s1 + $0x24] sm:$0xf]
  %v34 = vld [vmem:[%s1 + $0x28] sm:$0xf]
  %v35 = vld [vmem:[%s1 + $0x2c] sm:$0xf]
  %v36 = vld [vmem:[%s1 + $0x30] sm:$0xf]
  %v37 = vld [vmem:[%s1 + $0x34] sm:$0xf]
  %v38 = vld [vmem:[%s1 + $0x38] sm:$0xf]
  %v39 = vld [vmem:[%s1 + $0x3c] sm:$0xf]
  %v42 = vunpack.c.l.b16 %v22
  %v43 = vunpack.c.l.b16 %v23
  %v44 = vpack.c.b16 %v43, %v42
  %v62 = vunpack.c.l.b16 %v24
  %v63 = vunpack.c.l.b16 %v25
  %v64 = vunpack.c.l.b16 %v26
  %v65 = vunpack.c.l.b16 %v27
  %v66 = vunpack.c.l.b16 %v28
  %v67 = vunpack.c.l.b16 %v29
  %v68 = vunpack.c.l.b16 %v30
  %v69 = vunpack.c.l.b16 %v31
  %v70 = vunpack.c.l.b16 %v32
  %v71 = vunpack.c.l.b16 %v33
  %v72 = vunpack.c.l.b16 %v34
  %v73 = vunpack.c.l.b16 %v35
  %v74 = vunpack.c.l.b16 %v36
  %v75 = vunpack.c.l.b16 %v37
  %v76 = vunpack.c.l.b16 %v38
  %v77 = vunpack.c.l.b16 %v39
  %v78 = vpack.c.b16 %v63, %v62
  %v79 = vpack.c.b16 %v65, %v64
  %v80 = vpack.c.b16 %v67, %v66
  %v81 = vpack.c.b16 %v69, %v68
  %v82 = vpack.c.b16 %v71, %v70
  %v83 = vpack.c.b16 %v73, %v72
  %v84 = vpack.c.b16 %v75, %v74
  %v85 = vpack.c.b16 %v77, %v76
  %94 = vmatprep.subr.bf16.mxu0 0
  %95 = vmatpush1.bf16.msra.mxu0 %v78
  %96 = vmatprep.subr.bf16.mxu0 0
  %97 = vmatpush1.bf16.msra.mxu0 %v79
  %98 = vmatprep.subr.bf16.mxu0 0
  %99 = vmatpush1.bf16.msra.mxu0 %v80
  %100 = vmatprep.subr.bf16.mxu0 0
  %101 = vmatpush1.bf16.msra.mxu0 %v81
  %102 = vmatprep.subr.bf16.mxu0 0
  %103 = vmatpush1.bf16.msra.mxu0 %v82
  %104 = vmatprep.subr.bf16.mxu0 0
  %105 = vmatpush1.bf16.msra.mxu0 %v83
  %106 = vmatprep.subr.bf16.mxu0 0
  %107 = vmatpush1.bf16.msra.mxu0 %v84
  %108 = vmatprep.subr.bf16.mxu0 0
  %109 = vmatpush1.bf16.msra.mxu0 %v85
  %110 = vmatprep.subr.bf16.mxu0 0
  %111 = vmatpush1.bf16.msra.mxu0 0
  %112 = vmatprep.subr.bf16.mxu0 0
  %113 = vmatpush1.bf16.msra.mxu0 0
  %114 = vmatprep.subr.bf16.mxu0 0
  %115 = vmatpush1.bf16.msra.mxu0 0
  %116 = vmatprep.subr.bf16.mxu0 0
  %117 = vmatpush1.bf16.msra.mxu0 0
  %118 = vmatprep.subr.bf16.mxu0 0
  %119 = vmatpush1.bf16.msra.mxu0 0
  %120 = vmatprep.subr.bf16.mxu0 0
  %121 = vmatpush1.bf16.msra.mxu0 0
  %122 = vmatprep.subr.bf16.mxu0 0
  %123 = vmatpush1.bf16.msra.mxu0 0
  %124 = vmatprep.subr.bf16.mxu0 0
  %125 = vmatpush1.bf16.msra.mxu0 0
  %126 = vmatprep.mubr.bf16.mxu0 0
  %127 = vmatmul.mubr.bf16.gmra.mrb[0].mxu0 %v44
  %v128 = vpop.f32.mrb[0].mxu0
  %v129 = vadd.f32 0.0, %v128
  %v130 = vpop.f32.mrb[0].mxu0
  %v131 = vpop.f32.mrb[0].mxu0
  %v132 = vadd.f32 0.0, %v131
  %v133 = vpop.f32.mrb[0].mxu0
  %134 = vdwg.mxu0
  %135 = vmatprep.subr.bf16.mxu0 0
  %136 = vmatpush1.bf16.msra.mxu0 1065369472
  %137 = vmatprep.subr.bf16.mxu0 0
  %138 = vmatpush1.bf16.msra.mxu0 1065369472
  %139 = vmatprep.subr.bf16.mxu0 0
  %140 = vmatpush1.bf16.msra.mxu0 1065369472
  %141 = vmatprep.subr.bf16.mxu0 0
  %142 = vmatpush1.bf16.msra.mxu0 1065369472
  %143 = vmatprep.subr.bf16.mxu0 0
  %144 = vmatpush1.bf16.msra.mxu0 1065369472
  %145 = vmatprep.subr.bf16.mxu0 0
  %146 = vmatpush1.bf16.msra.mxu0 1065369472
  %147 = vmatprep.subr.bf16.mxu0 0
  %148 = vmatpush1.bf16.msra.mxu0 1065369472
  %149 = vmatprep.subr.bf16.mxu0 0
  %150 = vmatpush1.bf16.msra.mxu0 1065369472
  %151 = vmatprep.subr.bf16.mxu0 0
  %152 = vmatpush1.bf16.msra.mxu0 0
  %153 = vmatprep.subr.bf16.mxu0 0
  %154 = vmatpush1.bf16.msra.mxu0 0
  %155 = vmatprep.subr.bf16.mxu0 0
  %156 = vmatpush1.bf16.msra.mxu0 0
  %157 = vmatprep.subr.bf16.mxu0 0
  %158 = vmatpush1.bf16.msra.mxu0 0
  %159 = vmatprep.subr.bf16.mxu0 0
  %160 = vmatpush1.bf16.msra.mxu0 0
  %161 = vmatprep.subr.bf16.mxu0 0
  %162 = vmatpush1.bf16.msra.mxu0 0
  %163 = vmatprep.subr.bf16.mxu0 0
  %164 = vmatpush1.bf16.msra.mxu0 0
  %165 = vmatprep.subr.bf16.mxu0 0
  %166 = vmatpush1.bf16.msra.mxu0 0
  %167 = vmatprep.mubr.bf16.mxu0 0
  %168 = vmatmul.mubr.bf16.gmra.mrb[0].mxu0 %v44
  %v169 = vpop.f32.mrb[0].mxu0
  %v170 = vadd.f32 0.0, %v169
  %v171 = vpop.f32.mrb[0].mxu0
  %v172 = vpop.f32.mrb[0].mxu0
  %v173 = vadd.f32 0.0, %v172
  %v174 = vpop.f32.mrb[0].mxu0
  %175 = vdwg.mxu0
  %v176 = vmax.f32 %v170, 1.0
  %v177 = vmax.f32 %v173, 1.0
  %v178 = vrcp.pop %v176
  %v179 = vrcp.pop %v177
  %181 = vset.pattern.permute.xlu0 0
  %182 = vperm.xlu0 %181, %v178
  %v183 = vpop.permute.xlu0 %182
  %186 = vset.pattern.permute.xlu0 0
  %187 = vperm.xlu0 %186, %v179
  %v188 = vpop.permute.xlu0 %187
  %v190 = vmul.f32 %v129, %v183
  %v191 = vmul.f32 %v132, %v188
  %v192 = vld [vmem:[%s2] sm:$0xf]
  %v193 = vld [vmem:[%s2 + $0x4] sm:$0xf]
  %v194 = vld [vmem:[%s3] sm:$0xf]
  %v195 = vld [vmem:[%s3 + $0x4] sm:$0xf]
  %v196 = vld [vmem:[%s3 + $0x8] sm:$0xf]
  %v197 = vld [vmem:[%s3 + $0xc] sm:$0xf]
  %v198 = vld [vmem:[%s3 + $0x10] sm:$0xf]
  %v199 = vld [vmem:[%s3 + $0x14] sm:$0xf]
  %v200 = vld [vmem:[%s3 + $0x18] sm:$0xf]
  %v201 = vld [vmem:[%s3 + $0x1c] sm:$0xf]
  %v202 = vld [vmem:[%s3 + $0x20] sm:$0xf]
  %v203 = vld [vmem:[%s3 + $0x24] sm:$0xf]
  %v204 = vld [vmem:[%s3 + $0x28] sm:$0xf]
  %v205 = vld [vmem:[%s3 + $0x2c] sm:$0xf]
  %v206 = vld [vmem:[%s3 + $0x30] sm:$0xf]
  %v207 = vld [vmem:[%s3 + $0x34] sm:$0xf]
  %v208 = vld [vmem:[%s3 + $0x38] sm:$0xf]
  %v209 = vld [vmem:[%s3 + $0x3c] sm:$0xf]
  %v212 = vunpack.c.l.b16 %v192
  %v213 = vunpack.c.l.b16 %v193
  %v214 = vpack.c.b16 %v213, %v212
  %v232 = vunpack.c.l.b16 %v194
  %v233 = vunpack.c.l.b16 %v195
  %v234 = vunpack.c.l.b16 %v196
  %v235 = vunpack.c.l.b16 %v197
  %v236 = vunpack.c.l.b16 %v198
  %v237 = vunpack.c.l.b16 %v199
  %v238 = vunpack.c.l.b16 %v200
  %v239 = vunpack.c.l.b16 %v201
  %v240 = vunpack.c.l.b16 %v202
  %v241 = vunpack.c.l.b16 %v203
  %v242 = vunpack.c.l.b16 %v204
  %v243 = vunpack.c.l.b16 %v205
  %v244 = vunpack.c.l.b16 %v206
  %v245 = vunpack.c.l.b16 %v207
  %v246 = vunpack.c.l.b16 %v208
  %v247 = vunpack.c.l.b16 %v209
  %v248 = vpack.c.b16 %v233, %v232
  %v249 = vpack.c.b16 %v235, %v234
  %v250 = vpack.c.b16 %v237, %v236
  %v251 = vpack.c.b16 %v239, %v238
  %v252 = vpack.c.b16 %v241, %v240
  %v253 = vpack.c.b16 %v243, %v242
  %v254 = vpack.c.b16 %v245, %v244
  %v255 = vpack.c.b16 %v247, %v246
  %264 = vmatprep.subr.bf16.mxu0 0
  %265 = vmatpush1.bf16.msra.mxu0 %v248
  %266 = vmatprep.subr.bf16.mxu0 0
  %267 = vmatpush1.bf16.msra.mxu0 %v249
  %268 = vmatprep.subr.bf16.mxu0 0
  %269 = vmatpush1.bf16.msra.mxu0 %v250
  %270 = vmatprep.subr.bf16.mxu0 0
  %271 = vmatpush1.bf16.msra.mxu0 %v251
  %272 = vmatprep.subr.bf16.mxu0 0
  %273 = vmatpush1.bf16.msra.mxu0 %v252
  %274 = vmatprep.subr.bf16.mxu0 0
  %275 = vmatpush1.bf16.msra.mxu0 %v253
  %276 = vmatprep.subr.bf16.mxu0 0
  %277 = vmatpush1.bf16.msra.mxu0 %v254
  %278 = vmatprep.subr.bf16.mxu0 0
  %279 = vmatpush1.bf16.msra.mxu0 %v255
  %280 = vmatprep.subr.bf16.mxu0 0
  %281 = vmatpush1.bf16.msra.mxu0 0
  %282 = vmatprep.subr.bf16.mxu0 0
  %283 = vmatpush1.bf16.msra.mxu0 0
  %284 = vmatprep.subr.bf16.mxu0 0
  %285 = vmatpush1.bf16.msra.mxu0 0
  %286 = vmatprep.subr.bf16.mxu0 0
  %287 = vmatpush1.bf16.msra.mxu0 0
  %288 = vmatprep.subr.bf16.mxu0 0
  %289 = vmatpush1.bf16.msra.mxu0 0
  %290 = vmatprep.subr.bf16.mxu0 0
  %291 = vmatpush1.bf16.msra.mxu0 0
  %292 = vmatprep.subr.bf16.mxu0 0
  %293 = vmatpush1.bf16.msra.mxu0 0
  %294 = vmatprep.subr.bf16.mxu0 0
  %295 = vmatpush1.bf16.msra.mxu0 0
  %296 = vmatprep.mubr.bf16.mxu0 0
  %297 = vmatmul.mubr.bf16.gmra.mrb[0].mxu0 %v214
  %v298 = vpop.f32.mrb[0].mxu0
  %v299 = vadd.f32 0.0, %v298
  %v300 = vpop.f32.mrb[0].mxu0
  %v301 = vpop.f32.mrb[0].mxu0
  %v302 = vadd.f32 0.0, %v301
  %v303 = vpop.f32.mrb[0].mxu0
  %304 = vdwg.mxu0
  %v305 = vadd.f32 %v190, %v299
  %v306 = vadd.f32 %v191, %v302
  %v307 = vld [vmem:[%s4] sm:$0x1]
  %v309 = vlaneseq
  %v310 = vshrl.u32 %v309, 7
  %v311 = vsub.s32 0, %v310
  %v312 = vrot.slane %v307, %v311
  %v314 = vadd.f32 %v305, %v312
  %v315 = vadd.f32 %v306, %v312
  %v316 = vmax.f32 %v314, 0.0
  %v317 = vmax.f32 %v315, 0.0
  %v318 = vpack.c.bf16 %v317, %v316
  %v320 = vunpack.c.l.b16 %v318
  %v321 = vunpack.c.h.b16 %v318
  %v322 = vpack.c.b16 %v320, %v320
  %v323 = vpack.c.b16 %v321, %v321
  %326 = vst [vmem:[%s5] sm:$0xf] %v322
  %327 = vst [vmem:[%s5 + $0x4] sm:$0xf] %v323
  // Predicated region
  $region22: #{graphsage_forward.9} parent=0 // pred_check
    _
  $region23: #{graphsage_forward.9} parent=0 // pred_check_branch
    %329 = sbr.rel (0) target = $region25
  $region24: #{graphsage_forward.9} parent=0 // pred_region
    _
  $region25: #{graphsage_forward.9} parent=0 // pred_fallthru
    _
  // Predicated region
  $region26: #{graphsage_forward.9} parent=0 // pred_check
    _
  $region27: #{graphsage_forward.9} parent=0 // pred_check_branch
    %331 = sbr.rel (0) target = $region29
  $region28: #{graphsage_forward.9} parent=0 // pred_region
    _
  $region29: #{graphsage_forward.9} parent=0 // pred_fallthru
    _

// kernel: graphsage_forward.11
$region0: #{graphsage_forward.11}
  #allocation0 [shape = 'u32[]', space=smem, size = 0x4, offset = 0x4, fixed_abs, tag = 'smem constant byte address 0x4 - core index']
  #allocation1 [shape = 'u32[144,128]{1,0:T(1,128)}', space=vmem, size = 0x12000, scoped, tag = 'internal scratch']
  %s0 = inlined_call_operand.vmem [shape: bf16[16,128], index: 0, kind: input, shape index: {}]
  %s1 = inlined_call_operand.vmem [shape: bf16[16,128], index: 1, kind: input, shape index: {}]
  %s2 = inlined_call_operand.vmem [shape: bf16[128,128], index: 2, kind: input, shape index: {}]
  %s3 = inlined_call_operand.vmem [shape: bf16[128,128], index: 3, kind: input, shape index: {}]
  %s4 = inlined_call_operand.vmem [shape: f32[1,128], index: 4, kind: input, shape index: {}]
  %s5 = inlined_call_operand.vmem [shape: bf16[128,128], index: 5, kind: output, shape index: {}]
  %s6 = sld [smem:[#allocation0]]
  $region30: #{graphsage_forward.11} parent=0
    _
  %s8 = ssub.s32 1, %s6
  %s9 = scalar_select 0, %s8, %s6
  // Predicated region
  $region2: #{graphsage_forward.11} parent=0 // pred_check
    _
  $region3: #{graphsage_forward.11} parent=0 // pred_check_branch
    %11 = sbr.rel (0) target = $region5
  $region4: #{graphsage_forward.11} parent=0 // pred_region
    _
  $region5: #{graphsage_forward.11} parent=0 // pred_fallthru
    _
  // Predicated region
  $region6: #{graphsage_forward.11} parent=0 // pred_check
    _
  $region7: #{graphsage_forward.11} parent=0 // pred_check_branch
    %13 = sbr.rel (0) target = $region9
  $region8: #{graphsage_forward.11} parent=0 // pred_region
    _
  $region9: #{graphsage_forward.11} parent=0 // pred_fallthru
    _
  // Predicated region
  $region10: #{graphsage_forward.11} parent=0 // pred_check
    _
  $region11: #{graphsage_forward.11} parent=0 // pred_check_branch
    %15 = sbr.rel (0) target = $region13
  $region12: #{graphsage_forward.11} parent=0 // pred_region
    _
  $region13: #{graphsage_forward.11} parent=0 // pred_fallthru
    _
  // Predicated region
  $region14: #{graphsage_forward.11} parent=0 // pred_check
    _
  $region15: #{graphsage_forward.11} parent=0 // pred_check_branch
    %17 = sbr.rel (0) target = $region17
  $region16: #{graphsage_forward.11} parent=0 // pred_region
    _
  $region17: #{graphsage_forward.11} parent=0 // pred_fallthru
    _
  // Predicated region
  $region18: #{graphsage_forward.11} parent=0 // pred_check
    _
  $region19: #{graphsage_forward.11} parent=0 // pred_check_branch
    %19 = sbr.rel (0) target = $region21
  $region20: #{graphsage_forward.11} parent=0 // pred_region
    _
  $region21: #{graphsage_forward.11} parent=0 // pred_fallthru
    _
  %v22 = vld [vmem:[%s0] sm:$0xf]
  %v23 = vld [vmem:[%s0 + $0x4] sm:$0xf]
  %v24 = vld [vmem:[%s1] sm:$0xf]
  %v25 = vld [vmem:[%s1 + $0x4] sm:$0xf]
  %v28 = vunpack.c.l.b16 %v22
  %v29 = vunpack.c.l.b16 %v23
  %v30 = vpack.c.b16 %v29, %v28
  %32 = vxpose.xlu0.c.b16.start [1/8] %v30, 128
  %33 = vxpose.xlu0.c.b16.cont [2/8] 0, 128
  %34 = vxpose.xlu0.c.b16.cont [3/8] 0, 128
  %35 = vxpose.xlu0.c.b16.cont [4/8] 0, 128
  %36 = vxpose.xlu0.c.b16.cont [5/8] 0, 128
  %37 = vxpose.xlu0.c.b16.cont [6/8] 0, 128
  %38 = vxpose.xlu0.c.b16.cont [7/8] 0, 128
  %39 = vxpose.xlu0.c.b16.end [8/8] 0, 128
  %v40 = vpop.trf.xlu0
  %v41 = vpop.trf.xlu0
  %v42 = vpop.trf.xlu0
  %v43 = vpop.trf.xlu0
  %v44 = vpop.trf.xlu0
  %v45 = vpop.trf.xlu0
  %v46 = vpop.trf.xlu0
  %v47 = vpop.trf.xlu0
  %v50 = vunpack.c.l.b16 %v24
  %v51 = vunpack.c.l.b16 %v25
  %v52 = vpack.c.b16 %v51, %v50
  %vm54 = vcmask 130048
  %v56 = vsel %vm54, %v40, 0
  %v59 = vsel %vm54, %v41, 0
  %v62 = vsel %vm54, %v42, 0
  %v65 = vsel %vm54, %v43, 0
  %v68 = vsel %vm54, %v44, 0
  %v71 = vsel %vm54, %v45, 0
  %v74 = vsel %vm54, %v46, 0
  %v77 = vsel %vm54, %v47, 0
  %79 = vmatprep.subr.bf16.mxu0 0
  %80 = vmatpush1.bf16.msra.mxu0 %v52
  %81 = vmatprep.subr.bf16.mxu0 0
  %82 = vmatpush1.bf16.msra.mxu0 0
  %83 = vmatprep.subr.bf16.mxu0 0
  %84 = vmatpush1.bf16.msra.mxu0 0
  %85 = vmatprep.subr.bf16.mxu0 0
  %86 = vmatpush1.bf16.msra.mxu0 0
  %87 = vmatprep.subr.bf16.mxu0 0
  %88 = vmatpush1.bf16.msra.mxu0 0
  %89 = vmatprep.subr.bf16.mxu0 0
  %90 = vmatpush1.bf16.msra.mxu0 0
  %91 = vmatprep.subr.bf16.mxu0 0
  %92 = vmatpush1.bf16.msra.mxu0 0
  %93 = vmatprep.subr.bf16.mxu0 0
  %94 = vmatpush1.bf16.msra.mxu0 0
  %95 = vmatprep.subr.bf16.mxu0 0
  %96 = vmatpush1.bf16.msra.mxu0 0
  %97 = vmatprep.subr.bf16.mxu0 0
  %98 = vmatpush1.bf16.msra.mxu0 0
  %99 = vmatprep.subr.bf16.mxu0 0
  %100 = vmatpush1.bf16.msra.mxu0 0
  %101 = vmatprep.subr.bf16.mxu0 0
  %102 = vmatpush1.bf16.msra.mxu0 0
  %103 = vmatprep.subr.bf16.mxu0 0
  %104 = vmatpush1.bf16.msra.mxu0 0
  %105 = vmatprep.subr.bf16.mxu0 0
  %106 = vmatpush1.bf16.msra.mxu0 0
  %107 = vmatprep.subr.bf16.mxu0 0
  %108 = vmatpush1.bf16.msra.mxu0 0
  %109 = vmatprep.subr.bf16.mxu0 0
  %110 = vmatpush1.bf16.msra.mxu0 0
  %111 = vmatprep.mubr.bf16.mxu0 0
  %112 = vmatmul.mubr.bf16.gmra.mrb[0].mxu0 %v56
  %v113 = vpop.f32.mrb[0].mxu0
  %v114 = vadd.f32 0.0, %v113
  %v115 = vpop.f32.mrb[0].mxu0
  %v116 = vpop.f32.mrb[0].mxu0
  %v117 = vadd.f32 0.0, %v116
  %v118 = vpop.f32.mrb[0].mxu0
  %119 = vmatprep.mubr.bf16.mxu0 0
  %120 = vmatmul.mubr.bf16.gmra.mrb[0].mxu0 %v59
  %v121 = vpop.f32.mrb[0].mxu0
  %v122 = vadd.f32 0.0, %v121
  %v123 = vpop.f32.mrb[0].mxu0
  %v124 = vpop.f32.mrb[0].mxu0
  %v125 = vadd.f32 0.0, %v124
  %v126 = vpop.f32.mrb[0].mxu0
  %127 = vmatprep.mubr.bf16.mxu0 0
  %128 = vmatmul.mubr.bf16.gmra.mrb[0].mxu0 %v62
  %v129 = vpop.f32.mrb[0].mxu0
  %v130 = vadd.f32 0.0, %v129
  %v131 = vpop.f32.mrb[0].mxu0
  %v132 = vpop.f32.mrb[0].mxu0
  %v133 = vadd.f32 0.0, %v132
  %v134 = vpop.f32.mrb[0].mxu0
  %135 = vmatprep.mubr.bf16.mxu0 0
  %136 = vmatmul.mubr.bf16.gmra.mrb[0].mxu0 %v65
  %v137 = vpop.f32.mrb[0].mxu0
  %v138 = vadd.f32 0.0, %v137
  %v139 = vpop.f32.mrb[0].mxu0
  %v140 = vpop.f32.mrb[0].mxu0
  %v141 = vadd.f32 0.0, %v140
  %v142 = vpop.f32.mrb[0].mxu0
  %143 = vmatprep.mubr.bf16.mxu0 0
  %144 = vmatmul.mubr.bf16.gmra.mrb[0].mxu0 %v68
  %v145 = vpop.f32.mrb[0].mxu0
  %v146 = vadd.f32 0.0, %v145
  %v147 = vpop.f32.mrb[0].mxu0
  %v148 = vpop.f32.mrb[0].mxu0
  %v149 = vadd.f32 0.0, %v148
  %v150 = vpop.f32.mrb[0].mxu0
  %151 = vmatprep.mubr.bf16.mxu0 0
  %152 = vmatmul.mubr.bf16.gmra.mrb[0].mxu0 %v71
  %v153 = vpop.f32.mrb[0].mxu0
  %v154 = vadd.f32 0.0, %v153
  %v155 = vpop.f32.mrb[0].mxu0
  %v156 = vpop.f32.mrb[0].mxu0
  %v157 = vadd.f32 0.0, %v156
  %v158 = vpop.f32.mrb[0].mxu0
  %159 = vmatprep.mubr.bf16.mxu0 0
  %160 = vmatmul.mubr.bf16.gmra.mrb[0].mxu0 %v74
  %v161 = vpop.f32.mrb[0].mxu0
  %v162 = vadd.f32 0.0, %v161
  %v163 = vpop.f32.mrb[0].mxu0
  %v164 = vpop.f32.mrb[0].mxu0
  %v165 = vadd.f32 0.0, %v164
  %v166 = vpop.f32.mrb[0].mxu0
  %167 = vmatprep.mubr.bf16.mxu0 0
  %168 = vmatmul.mubr.bf16.gmra.mrb[0].mxu0 %v77
  %v169 = vpop.f32.mrb[0].mxu0
  %v170 = vadd.f32 0.0, %v169
  %v171 = vpop.f32.mrb[0].mxu0
  %v172 = vpop.f32.mrb[0].mxu0
  %v173 = vadd.f32 0.0, %v172
  %v174 = vpop.f32.mrb[0].mxu0
  %175 = vdwg.mxu0
  %176 = vmatprep.subr.bf16.mxu0 0
  %177 = vmatpush1.bf16.msra.mxu0 1065369472
  %178 = vmatprep.subr.bf16.mxu0 0
  %179 = vmatpush1.bf16.msra.mxu0 0
  %180 = vmatprep.subr.bf16.mxu0 0
  %181 = vmatpush1.bf16.msra.mxu0 0
  %182 = vmatprep.subr.bf16.mxu0 0
  %183 = vmatpush1.bf16.msra.mxu0 0
  %184 = vmatprep.subr.bf16.mxu0 0
  %185 = vmatpush1.bf16.msra.mxu0 0
  %186 = vmatprep.subr.bf16.mxu0 0
  %187 = vmatpush1.bf16.msra.mxu0 0
  %188 = vmatprep.subr.bf16.mxu0 0
  %189 = vmatpush1.bf16.msra.mxu0 0
  %190 = vmatprep.subr.bf16.mxu0 0
  %191 = vmatpush1.bf16.msra.mxu0 0
  %192 = vmatprep.subr.bf16.mxu0 0
  %193 = vmatpush1.bf16.msra.mxu0 0
  %194 = vmatprep.subr.bf16.mxu0 0
  %195 = vmatpush1.bf16.msra.mxu0 0
  %196 = vmatprep.subr.bf16.mxu0 0
  %197 = vmatpush1.bf16.msra.mxu0 0
  %198 = vmatprep.subr.bf16.mxu0 0
  %199 = vmatpush1.bf16.msra.mxu0 0
  %200 = vmatprep.subr.bf16.mxu0 0
  %201 = vmatpush1.bf16.msra.mxu0 0
  %202 = vmatprep.subr.bf16.mxu0 0
  %203 = vmatpush1.bf16.msra.mxu0 0
  %204 = vmatprep.subr.bf16.mxu0 0
  %205 = vmatpush1.bf16.msra.mxu0 0
  %206 = vmatprep.subr.bf16.mxu0 0
  %207 = vmatpush1.bf16.msra.mxu0 0
  %208 = vmatprep.mubr.bf16.mxu0 0
  %209 = vmatmul.mubr.bf16.gmra.mrb[0].mxu0 %v56
  %v210 = vpop.f32.mrb[0].mxu0
  %v211 = vadd.f32 0.0, %v210
  %v212 = vpop.f32.mrb[0].mxu0
  %v213 = vpop.f32.mrb[0].mxu0
  %v214 = vadd.f32 0.0, %v213
  %v215 = vpop.f32.mrb[0].mxu0
  %216 = vmatprep.mubr.bf16.mxu0 0
  %217 = vmatmul.mubr.bf16.gmra.mrb[0].mxu0 %v59
  %v218 = vpop.f32.mrb[0].mxu0
  %v219 = vadd.f32 0.0, %v218
  %v220 = vpop.f32.mrb[0].mxu0
  %v221 = vpop.f32.mrb[0].mxu0
  %v222 = vadd.f32 0.0, %v221
  %v223 = vpop.f32.mrb[0].mxu0
  %224 = vmatprep.mubr.bf16.mxu0 0
  %225 = vmatmul.mubr.bf16.gmra.mrb[0].mxu0 %v62
  %v226 = vpop.f32.mrb[0].mxu0
  %v227 = vadd.f32 0.0, %v226
  %v228 = vpop.f32.mrb[0].mxu0
  %v229 = vpop.f32.mrb[0].mxu0
  %v230 = vadd.f32 0.0, %v229
  %v231 = vpop.f32.mrb[0].mxu0
  %232 = vmatprep.mubr.bf16.mxu0 0
  %233 = vmatmul.mubr.bf16.gmra.mrb[0].mxu0 %v65
  %v234 = vpop.f32.mrb[0].mxu0
  %v235 = vadd.f32 0.0, %v234
  %v236 = vpop.f32.mrb[0].mxu0
  %v237 = vpop.f32.mrb[0].mxu0
  %v238 = vadd.f32 0.0, %v237
  %v239 = vpop.f32.mrb[0].mxu0
  %240 = vmatprep.mubr.bf16.mxu0 0
  %241 = vmatmul.mubr.bf16.gmra.mrb[0].mxu0 %v68
  %v242 = vpop.f32.mrb[0].mxu0
  %v243 = vadd.f32 0.0, %v242
  %v244 = vpop.f32.mrb[0].mxu0
  %v245 = vpop.f32.mrb[0].mxu0
  %v246 = vadd.f32 0.0, %v245
  %v247 = vpop.f32.mrb[0].mxu0
  %248 = vmatprep.mubr.bf16.mxu0 0
  %249 = vmatmul.mubr.bf16.gmra.mrb[0].mxu0 %v71
  %v250 = vpop.f32.mrb[0].mxu0
  %v251 = vadd.f32 0.0, %v250
  %v252 = vpop.f32.mrb[0].mxu0
  %v253 = vpop.f32.mrb[0].mxu0
  %v254 = vadd.f32 0.0, %v253
  %v255 = vpop.f32.mrb[0].mxu0
  %256 = vmatprep.mubr.bf16.mxu0 0
  %257 = vmatmul.mubr.bf16.gmra.mrb[0].mxu0 %v74
  %v258 = vpop.f32.mrb[0].mxu0
  %v259 = vadd.f32 0.0, %v258
  %v260 = vpop.f32.mrb[0].mxu0
  %v261 = vpop.f32.mrb[0].mxu0
  %v262 = vadd.f32 0.0, %v261
  %v263 = vpop.f32.mrb[0].mxu0
  %264 = vmatprep.mubr.bf16.mxu0 0
  %265 = vmatmul.mubr.bf16.gmra.mrb[0].mxu0 %v77
  %v266 = vpop.f32.mrb[0].mxu0
  %v267 = vadd.f32 0.0, %v266
  %v268 = vpop.f32.mrb[0].mxu0
  %v269 = vpop.f32.mrb[0].mxu0
  %v270 = vadd.f32 0.0, %v269
  %v271 = vpop.f32.mrb[0].mxu0
  %272 = vdwg.mxu0
  %v273 = vmax.f32 %v211, 1.0
  %v274 = vmax.f32 %v214, 1.0
  %v275 = vmax.f32 %v219, 1.0
  %v276 = vmax.f32 %v222, 1.0
  %v277 = vmax.f32 %v227, 1.0
  %v278 = vmax.f32 %v230, 1.0
  %v279 = vmax.f32 %v235, 1.0
  %v280 = vmax.f32 %v238, 1.0
  %v281 = vmax.f32 %v243, 1.0
  %v282 = vmax.f32 %v246, 1.0
  %v283 = vmax.f32 %v251, 1.0
  %v284 = vmax.f32 %v254, 1.0
  %v285 = vmax.f32 %v259, 1.0
  %v286 = vmax.f32 %v262, 1.0
  %v287 = vmax.f32 %v267, 1.0
  %v288 = vmax.f32 %v270, 1.0
  %v289 = vrcp.pop %v273
  %v290 = vrcp.pop %v274
  %v291 = vrcp.pop %v275
  %v292 = vrcp.pop %v276
  %v293 = vrcp.pop %v277
  %v294 = vrcp.pop %v278
  %v295 = vrcp.pop %v279
  %v296 = vrcp.pop %v280
  %v297 = vrcp.pop %v281
  %v298 = vrcp.pop %v282
  %v299 = vrcp.pop %v283
  %v300 = vrcp.pop %v284
  %v301 = vrcp.pop %v285
  %v302 = vrcp.pop %v286
  %v303 = vrcp.pop %v287
  %v304 = vrcp.pop %v288
  %306 = vset.pattern.permute.xlu0 0
  %307 = vperm.xlu0 %306, %v289
  %v308 = vpop.permute.xlu0 %307
  %311 = vset.pattern.permute.xlu0 0
  %312 = vperm.xlu0 %311, %v290
  %v313 = vpop.permute.xlu0 %312
  %316 = vset.pattern.permute.xlu0 0
  %317 = vperm.xlu0 %316, %v291
  %v318 = vpop.permute.xlu0 %317
  %321 = vset.pattern.permute.xlu0 0
  %322 = vperm.xlu0 %321, %v292
  %v323 = vpop.permute.xlu0 %322
  %326 = vset.pattern.permute.xlu0 0
  %327 = vperm.xlu0 %326, %v293
  %v328 = vpop.permute.xlu0 %327
  %331 = vset.pattern.permute.xlu0 0
  %332 = vperm.xlu0 %331, %v294
  %v333 = vpop.permute.xlu0 %332
  %336 = vset.pattern.permute.xlu0 0
  %337 = vperm.xlu0 %336, %v295
  %v338 = vpop.permute.xlu0 %337
  %341 = vset.pattern.permute.xlu0 0
  %342 = vperm.xlu0 %341, %v296
  %v343 = vpop.permute.xlu0 %342
  %346 = vset.pattern.permute.xlu0 0
  %347 = vperm.xlu0 %346, %v297
  %v348 = vpop.permute.xlu0 %347
  %351 = vset.pattern.permute.xlu0 0
  %352 = vperm.xlu0 %351, %v298
  %v353 = vpop.permute.xlu0 %352
  %356 = vset.pattern.permute.xlu0 0
  %357 = vperm.xlu0 %356, %v299
  %v358 = vpop.permute.xlu0 %357
  %361 = vset.pattern.permute.xlu0 0
  %362 = vperm.xlu0 %361, %v300
  %v363 = vpop.permute.xlu0 %362
  %366 = vset.pattern.permute.xlu0 0
  %367 = vperm.xlu0 %366, %v301
  %v368 = vpop.permute.xlu0 %367
  %371 = vset.pattern.permute.xlu0 0
  %372 = vperm.xlu0 %371, %v302
  %v373 = vpop.permute.xlu0 %372
  %376 = vset.pattern.permute.xlu0 0
  %377 = vperm.xlu0 %376, %v303
  %v378 = vpop.permute.xlu0 %377
  %381 = vset.pattern.permute.xlu0 0
  %382 = vperm.xlu0 %381, %v304
  %v383 = vpop.permute.xlu0 %382
  %v385 = vmul.f32 %v114, %v308
  %v386 = vmul.f32 %v117, %v313
  %v387 = vmul.f32 %v122, %v318
  %v388 = vmul.f32 %v125, %v323
  %v389 = vmul.f32 %v130, %v328
  %v390 = vmul.f32 %v133, %v333
  %v391 = vmul.f32 %v138, %v338
  %v392 = vmul.f32 %v141, %v343
  %v393 = vmul.f32 %v146, %v348
  %v394 = vmul.f32 %v149, %v353
  %v395 = vmul.f32 %v154, %v358
  %v396 = vmul.f32 %v157, %v363
  %v397 = vmul.f32 %v162, %v368
  %v398 = vmul.f32 %v165, %v373
  %v399 = vmul.f32 %v170, %v378
  %v400 = vmul.f32 %v173, %v383
  %v401 = vld [vmem:[%s2] sm:$0xf]
  %v402 = vld [vmem:[%s2 + $0x4] sm:$0xf]
  %v403 = vld [vmem:[%s2 + $0x8] sm:$0xf]
  %v404 = vld [vmem:[%s2 + $0xc] sm:$0xf]
  %v405 = vld [vmem:[%s2 + $0x10] sm:$0xf]
  %v406 = vld [vmem:[%s2 + $0x14] sm:$0xf]
  %v407 = vld [vmem:[%s2 + $0x18] sm:$0xf]
  %v408 = vld [vmem:[%s2 + $0x1c] sm:$0xf]
  %v409 = vld [vmem:[%s2 + $0x20] sm:$0xf]
  %v410 = vld [vmem:[%s2 + $0x24] sm:$0xf]
  %v411 = vld [vmem:[%s2 + $0x28] sm:$0xf]
  %v412 = vld [vmem:[%s2 + $0x2c] sm:$0xf]
  %v413 = vld [vmem:[%s2 + $0x30] sm:$0xf]
  %v414 = vld [vmem:[%s2 + $0x34] sm:$0xf]
  %v415 = vld [vmem:[%s2 + $0x38] sm:$0xf]
  %v416 = vld [vmem:[%s2 + $0x3c] sm:$0xf]
  %v417 = vld [vmem:[%s3] sm:$0xf]
  %v418 = vld [vmem:[%s3 + $0x4] sm:$0xf]
  %v419 = vld [vmem:[%s3 + $0x8] sm:$0xf]
  %v420 = vld [vmem:[%s3 + $0xc] sm:$0xf]
  %v421 = vld [vmem:[%s3 + $0x10] sm:$0xf]
  %v422 = vld [vmem:[%s3 + $0x14] sm:$0xf]
  %v423 = vld [vmem:[%s3 + $0x18] sm:$0xf]
  %v424 = vld [vmem:[%s3 + $0x1c] sm:$0xf]
  %v425 = vld [vmem:[%s3 + $0x20] sm:$0xf]
  %v426 = vld [vmem:[%s3 + $0x24] sm:$0xf]
  %v427 = vld [vmem:[%s3 + $0x28] sm:$0xf]
  %v428 = vld [vmem:[%s3 + $0x2c] sm:$0xf]
  %v429 = vld [vmem:[%s3 + $0x30] sm:$0xf]
  %v430 = vld [vmem:[%s3 + $0x34] sm:$0xf]
  %v431 = vld [vmem:[%s3 + $0x38] sm:$0xf]
  %v432 = vld [vmem:[%s3 + $0x3c] sm:$0xf]
  %v449 = vunpack.c.l.b16 %v401
  %v450 = vunpack.c.l.b16 %v402
  %v451 = vunpack.c.l.b16 %v403
  %v452 = vunpack.c.l.b16 %v404
  %v453 = vunpack.c.l.b16 %v405
  %v454 = vunpack.c.l.b16 %v406
  %v455 = vunpack.c.l.b16 %v407
  %v456 = vunpack.c.l.b16 %v408
  %v457 = vunpack.c.l.b16 %v409
  %v458 = vunpack.c.l.b16 %v410
  %v459 = vunpack.c.l.b16 %v411
  %v460 = vunpack.c.l.b16 %v412
  %v461 = vunpack.c.l.b16 %v413
  %v462 = vunpack.c.l.b16 %v414
  %v463 = vunpack.c.l.b16 %v415
  %v464 = vunpack.c.l.b16 %v416
  %v465 = vpack.c.b16 %v450, %v449
  %v466 = vpack.c.b16 %v452, %v451
  %v467 = vpack.c.b16 %v454, %v453
  %v468 = vpack.c.b16 %v456, %v455
  %v469 = vpack.c.b16 %v458, %v457
  %v470 = vpack.c.b16 %v460, %v459
  %v471 = vpack.c.b16 %v462, %v461
  %v472 = vpack.c.b16 %v464, %v463
  %v497 = vunpack.c.l.b16 %v417
  %v498 = vunpack.c.l.b16 %v418
  %v499 = vunpack.c.l.b16 %v419
  %v500 = vunpack.c.l.b16 %v420
  %v501 = vunpack.c.l.b16 %v421
  %v502 = vunpack.c.l.b16 %v422
  %v503 = vunpack.c.l.b16 %v423
  %v504 = vunpack.c.l.b16 %v424
  %v505 = vunpack.c.l.b16 %v425
  %v506 = vunpack.c.l.b16 %v426
  %v507 = vunpack.c.l.b16 %v427
  %v508 = vunpack.c.l.b16 %v428
  %v509 = vunpack.c.l.b16 %v429
  %v510 = vunpack.c.l.b16 %v430
  %v511 = vunpack.c.l.b16 %v431
  %v512 = vunpack.c.l.b16 %v432
  %v513 = vpack.c.b16 %v498, %v497
  %v514 = vpack.c.b16 %v500, %v499
  %v515 = vpack.c.b16 %v502, %v501
  %v516 = vpack.c.b16 %v504, %v503
  %v517 = vpack.c.b16 %v506, %v505
  %v518 = vpack.c.b16 %v508, %v507
  %v519 = vpack.c.b16 %v510, %v509
  %v520 = vpack.c.b16 %v512, %v511
  %529 = vmatprep.subr.bf16.mxu0 0
  %530 = vmatpush1.bf16.msra.mxu0 %v513
  %531 = vmatprep.subr.bf16.mxu0 0
  %532 = vmatpush1.bf16.msra.mxu0 %v514
  %533 = vmatprep.subr.bf16.mxu0 0
  %534 = vmatpush1.bf16.msra.mxu0 %v515
  %535 = vmatprep.subr.bf16.mxu0 0
  %536 = vmatpush1.bf16.msra.mxu0 %v516
  %537 = vmatprep.subr.bf16.mxu0 0
  %538 = vmatpush1.bf16.msra.mxu0 %v517
  %539 = vmatprep.subr.bf16.mxu0 0
  %540 = vmatpush1.bf16.msra.mxu0 %v518
  %541 = vmatprep.subr.bf16.mxu0 0
  %542 = vmatpush1.bf16.msra.mxu0 %v519
  %543 = vmatprep.subr.bf16.mxu0 0
  %544 = vmatpush1.bf16.msra.mxu0 %v520
  %545 = vmatprep.subr.bf16.mxu0 0
  %546 = vmatpush1.bf16.msra.mxu0 0
  %547 = vmatprep.subr.bf16.mxu0 0
  %548 = vmatpush1.bf16.msra.mxu0 0
  %549 = vmatprep.subr.bf16.mxu0 0
  %550 = vmatpush1.bf16.msra.mxu0 0
  %551 = vmatprep.subr.bf16.mxu0 0
  %552 = vmatpush1.bf16.msra.mxu0 0
  %553 = vmatprep.subr.bf16.mxu0 0
  %554 = vmatpush1.bf16.msra.mxu0 0
  %555 = vmatprep.subr.bf16.mxu0 0
  %556 = vmatpush1.bf16.msra.mxu0 0
  %557 = vmatprep.subr.bf16.mxu0 0
  %558 = vmatpush1.bf16.msra.mxu0 0
  %559 = vmatprep.subr.bf16.mxu0 0
  %560 = vmatpush1.bf16.msra.mxu0 0
  %561 = vmatprep.mubr.bf16.mxu0 0
  %562 = vmatmul.mubr.bf16.gmra.mrb[0].mxu0 %v465
  %v563 = vpop.f32.mrb[0].mxu0
  %v564 = vadd.f32 0.0, %v563
  %v565 = vpop.f32.mrb[0].mxu0
  %v566 = vpop.f32.mrb[0].mxu0
  %v567 = vadd.f32 0.0, %v566
  %v568 = vpop.f32.mrb[0].mxu0
  %569 = vmatprep.mubr.bf16.mxu0 0
  %570 = vmatmul.mubr.bf16.gmra.mrb[0].mxu0 %v466
  %v571 = vpop.f32.mrb[0].mxu0
  %v572 = vadd.f32 0.0, %v571
  %v573 = vpop.f32.mrb[0].mxu0
  %v574 = vpop.f32.mrb[0].mxu0
  %v575 = vadd.f32 0.0, %v574
  %v576 = vpop.f32.mrb[0].mxu0
  %577 = vmatprep.mubr.bf16.mxu0 0
  %578 = vmatmul.mubr.bf16.gmra.mrb[0].mxu0 %v467
  %v579 = vpop.f32.mrb[0].mxu0
  %v580 = vadd.f32 0.0, %v579
  %v581 = vpop.f32.mrb[0].mxu0
  %v582 = vpop.f32.mrb[0].mxu0
  %v583 = vadd.f32 0.0, %v582
  %v584 = vpop.f32.mrb[0].mxu0
  %585 = vmatprep.mubr.bf16.mxu0 0
  %586 = vmatmul.mubr.bf16.gmra.mrb[0].mxu0 %v468
  %v587 = vpop.f32.mrb[0].mxu0
  %v588 = vadd.f32 0.0, %v587
  %v589 = vpop.f32.mrb[0].mxu0
  %v590 = vpop.f32.mrb[0].mxu0
  %v591 = vadd.f32 0.0, %v590
  %v592 = vpop.f32.mrb[0].mxu0
  %593 = vmatprep.mubr.bf16.mxu0 0
  %594 = vmatmul.mubr.bf16.gmra.mrb[0].mxu0 %v469
  %v595 = vpop.f32.mrb[0].mxu0
  %v596 = vadd.f32 0.0, %v595
  %v597 = vpop.f32.mrb[0].mxu0
  %v598 = vpop.f32.mrb[0].mxu0
  %v599 = vadd.f32 0.0, %v598
  %v600 = vpop.f32.mrb[0].mxu0
  %601 = vmatprep.mubr.bf16.mxu0 0
  %602 = vmatmul.mubr.bf16.gmra.mrb[0].mxu0 %v470
  %v603 = vpop.f32.mrb[0].mxu0
  %v604 = vadd.f32 0.0, %v603
  %v605 = vpop.f32.mrb[0].mxu0
  %v606 = vpop.f32.mrb[0].mxu0
  %v607 = vadd.f32 0.0, %v606
  %v608 = vpop.f32.mrb[0].mxu0
  %609 = vmatprep.mubr.bf16.mxu0 0
  %610 = vmatmul.mubr.bf16.gmra.mrb[0].mxu0 %v471
  %v611 = vpop.f32.mrb[0].mxu0
  %v612 = vadd.f32 0.0, %v611
  %v613 = vpop.f32.mrb[0].mxu0
  %v614 = vpop.f32.mrb[0].mxu0
  %v615 = vadd.f32 0.0, %v614
  %v616 = vpop.f32.mrb[0].mxu0
  %617 = vmatprep.mubr.bf16.mxu0 0
  %618 = vmatmul.mubr.bf16.gmra.mrb[0].mxu0 %v472
  %v619 = vpop.f32.mrb[0].mxu0
  %v620 = vadd.f32 0.0, %v619
  %v621 = vpop.f32.mrb[0].mxu0
  %v622 = vpop.f32.mrb[0].mxu0
  %v623 = vadd.f32 0.0, %v622
  %v624 = vpop.f32.mrb[0].mxu0
  %625 = vdwg.mxu0
  %v626 = vadd.f32 %v385, %v564
  %v627 = vadd.f32 %v386, %v567
  %v628 = vadd.f32 %v387, %v572
  %v629 = vadd.f32 %v388, %v575
  %v630 = vadd.f32 %v389, %v580
  %v631 = vadd.f32 %v390, %v583
  %v632 = vadd.f32 %v391, %v588
  %v633 = vadd.f32 %v392, %v591
  %v634 = vadd.f32 %v393, %v596
  %v635 = vadd.f32 %v394, %v599
  %v636 = vadd.f32 %v395, %v604
  %v637 = vadd.f32 %v396, %v607
  %v638 = vadd.f32 %v397, %v612
  %v639 = vadd.f32 %v398, %v615
  %v640 = vadd.f32 %v399, %v620
  %v641 = vadd.f32 %v400, %v623
  %v642 = vld [vmem:[%s4] sm:$0x1]
  %v644 = vlaneseq
  %v645 = vshrl.u32 %v644, 7
  %v646 = vsub.s32 0, %v645
  %v647 = vrot.slane %v642, %v646
  %v649 = vadd.f32 %v626, %v647
  %v650 = vadd.f32 %v627, %v647
  %v651 = vadd.f32 %v628, %v647
  %v652 = vadd.f32 %v629, %v647
  %v653 = vadd.f32 %v630, %v647
  %v654 = vadd.f32 %v631, %v647
  %v655 = vadd.f32 %v632, %v647
  %v656 = vadd.f32 %v633, %v647
  %v657 = vadd.f32 %v634, %v647
  %v658 = vadd.f32 %v635, %v647
  %v659 = vadd.f32 %v636, %v647
  %v660 = vadd.f32 %v637, %v647
  %v661 = vadd.f32 %v638, %v647
  %v662 = vadd.f32 %v639, %v647
  %v663 = vadd.f32 %v640, %v647
  %v664 = vadd.f32 %v641, %v647
  %v665 = vmax.f32 %v649, 0.0
  %v666 = vmax.f32 %v650, 0.0
  %v667 = vmax.f32 %v651, 0.0
  %v668 = vmax.f32 %v652, 0.0
  %v669 = vmax.f32 %v653, 0.0
  %v670 = vmax.f32 %v654, 0.0
  %v671 = vmax.f32 %v655, 0.0
  %v672 = vmax.f32 %v656, 0.0
  %v673 = vmax.f32 %v657, 0.0
  %v674 = vmax.f32 %v658, 0.0
  %v675 = vmax.f32 %v659, 0.0
  %v676 = vmax.f32 %v660, 0.0
  %v677 = vmax.f32 %v661, 0.0
  %v678 = vmax.f32 %v662, 0.0
  %v679 = vmax.f32 %v663, 0.0
  %v680 = vmax.f32 %v664, 0.0
  %v681 = vpack.c.bf16 %v666, %v665
  %v682 = vpack.c.bf16 %v668, %v667
  %v683 = vpack.c.bf16 %v670, %v669
  %v684 = vpack.c.bf16 %v672, %v671
  %v685 = vpack.c.bf16 %v674, %v673
  %v686 = vpack.c.bf16 %v676, %v675
  %v687 = vpack.c.bf16 %v678, %v677
  %v688 = vpack.c.bf16 %v680, %v679
  %v697 = vunpack.c.l.b16 %v681
  %v698 = vunpack.c.h.b16 %v681
  %v699 = vunpack.c.l.b16 %v682
  %v700 = vunpack.c.h.b16 %v682
  %v701 = vunpack.c.l.b16 %v683
  %v702 = vunpack.c.h.b16 %v683
  %v703 = vunpack.c.l.b16 %v684
  %v704 = vunpack.c.h.b16 %v684
  %v705 = vunpack.c.l.b16 %v685
  %v706 = vunpack.c.h.b16 %v685
  %v707 = vunpack.c.l.b16 %v686
  %v708 = vunpack.c.h.b16 %v686
  %v709 = vunpack.c.l.b16 %v687
  %v710 = vunpack.c.h.b16 %v687
  %v711 = vunpack.c.l.b16 %v688
  %v712 = vunpack.c.h.b16 %v688
  %v713 = vpack.c.b16 %v697, %v697
  %v714 = vpack.c.b16 %v698, %v698
  %v715 = vpack.c.b16 %v699, %v699
  %v716 = vpack.c.b16 %v700, %v700
  %v717 = vpack.c.b16 %v701, %v701
  %v718 = vpack.c.b16 %v702, %v702
  %v719 = vpack.c.b16 %v703, %v703
  %v720 = vpack.c.b16 %v704, %v704
  %v721 = vpack.c.b16 %v705, %v705
  %v722 = vpack.c.b16 %v706, %v706
  %v723 = vpack.c.b16 %v707, %v707
  %v724 = vpack.c.b16 %v708, %v708
  %v725 = vpack.c.b16 %v709, %v709
  %v726 = vpack.c.b16 %v710, %v710
  %v727 = vpack.c.b16 %v711, %v711
  %v728 = vpack.c.b16 %v712, %v712
  %745 = vst [vmem:[%s5] sm:$0xf] %v713
  %746 = vst [vmem:[%s5 + $0x4] sm:$0xf] %v714
  %747 = vst [vmem:[%s5 + $0x8] sm:$0xf] %v715
  %748 = vst [vmem:[%s5 + $0xc] sm:$0xf] %v716
  %749 = vst [vmem:[%s5 + $0x10] sm:$0xf] %v717
  %750 = vst [vmem:[%s5 + $0x14] sm:$0xf] %v718
  %751 = vst [vmem:[%s5 + $0x18] sm:$0xf] %v719
  %752 = vst [vmem:[%s5 + $0x1c] sm:$0xf] %v720
  %753 = vst [vmem:[%s5 + $0x20] sm:$0xf] %v721
  %754 = vst [vmem:[%s5 + $0x24] sm:$0xf] %v722
  %755 = vst [vmem:[%s5 + $0x28] sm:$0xf] %v723
  %756 = vst [vmem:[%s5 + $0x2c] sm:$0xf] %v724
  %757 = vst [vmem:[%s5 + $0x30] sm:$0xf] %v725
  %758 = vst [vmem:[%s5 + $0x34] sm:$0xf] %v726
  %759 = vst [vmem:[%s5 + $0x38] sm:$0xf] %v727
  %760 = vst [vmem:[%s5 + $0x3c] sm:$0xf] %v728
  // Predicated region
  $region22: #{graphsage_forward.11} parent=0 // pred_check
    _
  $region23: #{graphsage_forward.11} parent=0 // pred_check_branch
    %762 = sbr.rel (0) target = $region25
  $region24: #{graphsage_forward.11} parent=0 // pred_region
    _
  $region25: #{graphsage_forward.11} parent=0 // pred_fallthru
    _
  // Predicated region
  $region26: #{graphsage_forward.11} parent=0 // pred_check
    _
  $region27: #{graphsage_forward.11} parent=0 // pred_check_branch
    %764 = sbr.rel (0) target = $region29
  $region28: #{graphsage_forward.11} parent=0 // pred_region
    _
  $region29: #{graphsage_forward.11} parent=0 // pred_fallthru
    _

// kernel: graphsage_forward.15
$region0: #{graphsage_forward.15}
  #allocation0 [shape = 'u32[]', space=smem, size = 0x4, offset = 0x4, fixed_abs, tag = 'smem constant byte address 0x4 - core index']
  #allocation1 [shape = 'u32[144,128]{1,0:T(1,128)}', space=vmem, size = 0x12000, scoped, tag = 'internal scratch']
  %s0 = inlined_call_operand.vmem [shape: bf16[16,128], index: 0, kind: input, shape index: {}]
  %s1 = inlined_call_operand.vmem [shape: bf16[16,128], index: 1, kind: input, shape index: {}]
  %s2 = inlined_call_operand.vmem [shape: bf16[128,128], index: 2, kind: input, shape index: {}]
  %s3 = inlined_call_operand.vmem [shape: bf16[128,128], index: 3, kind: input, shape index: {}]
  %s4 = inlined_call_operand.vmem [shape: f32[1,128], index: 4, kind: input, shape index: {}]
  %s5 = inlined_call_operand.vmem [shape: f32[128,128], index: 5, kind: output, shape index: {}]
  %s6 = sld [smem:[#allocation0]]
  $region30: #{graphsage_forward.15} parent=0
    _
  %s8 = ssub.s32 1, %s6
  %s9 = scalar_select 0, %s8, %s6
  // Predicated region
  $region2: #{graphsage_forward.15} parent=0 // pred_check
    _
  $region3: #{graphsage_forward.15} parent=0 // pred_check_branch
    %11 = sbr.rel (0) target = $region5
  $region4: #{graphsage_forward.15} parent=0 // pred_region
    _
  $region5: #{graphsage_forward.15} parent=0 // pred_fallthru
    _
  // Predicated region
  $region6: #{graphsage_forward.15} parent=0 // pred_check
    _
  $region7: #{graphsage_forward.15} parent=0 // pred_check_branch
    %13 = sbr.rel (0) target = $region9
  $region8: #{graphsage_forward.15} parent=0 // pred_region
    _
  $region9: #{graphsage_forward.15} parent=0 // pred_fallthru
    _
  // Predicated region
  $region10: #{graphsage_forward.15} parent=0 // pred_check
    _
  $region11: #{graphsage_forward.15} parent=0 // pred_check_branch
    %15 = sbr.rel (0) target = $region13
  $region12: #{graphsage_forward.15} parent=0 // pred_region
    _
  $region13: #{graphsage_forward.15} parent=0 // pred_fallthru
    _
  // Predicated region
  $region14: #{graphsage_forward.15} parent=0 // pred_check
    _
  $region15: #{graphsage_forward.15} parent=0 // pred_check_branch
    %17 = sbr.rel (0) target = $region17
  $region16: #{graphsage_forward.15} parent=0 // pred_region
    _
  $region17: #{graphsage_forward.15} parent=0 // pred_fallthru
    _
  // Predicated region
  $region18: #{graphsage_forward.15} parent=0 // pred_check
    _
  $region19: #{graphsage_forward.15} parent=0 // pred_check_branch
    %19 = sbr.rel (0) target = $region21
  $region20: #{graphsage_forward.15} parent=0 // pred_region
    _
  $region21: #{graphsage_forward.15} parent=0 // pred_fallthru
    _
  %v22 = vld [vmem:[%s0] sm:$0xf]
  %v23 = vld [vmem:[%s0 + $0x4] sm:$0xf]
  %v24 = vld [vmem:[%s1] sm:$0xf]
  %v25 = vld [vmem:[%s1 + $0x4] sm:$0xf]
  %v28 = vunpack.c.l.b16 %v22
  %v29 = vunpack.c.l.b16 %v23
  %v30 = vpack.c.b16 %v29, %v28
  %32 = vxpose.xlu0.c.b16.start [1/8] %v30, 128
  %33 = vxpose.xlu0.c.b16.cont [2/8] 0, 128
  %34 = vxpose.xlu0.c.b16.cont [3/8] 0, 128
  %35 = vxpose.xlu0.c.b16.cont [4/8] 0, 128
  %36 = vxpose.xlu0.c.b16.cont [5/8] 0, 128
  %37 = vxpose.xlu0.c.b16.cont [6/8] 0, 128
  %38 = vxpose.xlu0.c.b16.cont [7/8] 0, 128
  %39 = vxpose.xlu0.c.b16.end [8/8] 0, 128
  %v40 = vpop.trf.xlu0
  %v41 = vpop.trf.xlu0
  %v42 = vpop.trf.xlu0
  %v43 = vpop.trf.xlu0
  %v44 = vpop.trf.xlu0
  %v45 = vpop.trf.xlu0
  %v46 = vpop.trf.xlu0
  %v47 = vpop.trf.xlu0
  %v50 = vunpack.c.l.b16 %v24
  %v51 = vunpack.c.l.b16 %v25
  %v52 = vpack.c.b16 %v51, %v50
  %vm54 = vcmask 130048
  %v56 = vsel %vm54, %v40, 0
  %v59 = vsel %vm54, %v41, 0
  %v62 = vsel %vm54, %v42, 0
  %v65 = vsel %vm54, %v43, 0
  %v68 = vsel %vm54, %v44, 0
  %v71 = vsel %vm54, %v45, 0
  %v74 = vsel %vm54, %v46, 0
  %v77 = vsel %vm54, %v47, 0
  %79 = vmatprep.subr.bf16.mxu0 0
  %80 = vmatpush1.bf16.msra.mxu0 %v52
  %81 = vmatprep.subr.bf16.mxu0 0
  %82 = vmatpush1.bf16.msra.mxu0 0
  %83 = vmatprep.subr.bf16.mxu0 0
  %84 = vmatpush1.bf16.msra.mxu0 0
  %85 = vmatprep.subr.bf16.mxu0 0
  %86 = vmatpush1.bf16.msra.mxu0 0
  %87 = vmatprep.subr.bf16.mxu0 0
  %88 = vmatpush1.bf16.msra.mxu0 0
  %89 = vmatprep.subr.bf16.mxu0 0
  %90 = vmatpush1.bf16.msra.mxu0 0
  %91 = vmatprep.subr.bf16.mxu0 0
  %92 = vmatpush1.bf16.msra.mxu0 0
  %93 = vmatprep.subr.bf16.mxu0 0
  %94 = vmatpush1.bf16.msra.mxu0 0
  %95 = vmatprep.subr.bf16.mxu0 0
  %96 = vmatpush1.bf16.msra.mxu0 0
  %97 = vmatprep.subr.bf16.mxu0 0
  %98 = vmatpush1.bf16.msra.mxu0 0
  %99 = vmatprep.subr.bf16.mxu0 0
  %100 = vmatpush1.bf16.msra.mxu0 0
  %101 = vmatprep.subr.bf16.mxu0 0
  %102 = vmatpush1.bf16.msra.mxu0 0
  %103 = vmatprep.subr.bf16.mxu0 0
  %104 = vmatpush1.bf16.msra.mxu0 0
  %105 = vmatprep.subr.bf16.mxu0 0
  %106 = vmatpush1.bf16.msra.mxu0 0
  %107 = vmatprep.subr.bf16.mxu0 0
  %108 = vmatpush1.bf16.msra.mxu0 0
  %109 = vmatprep.subr.bf16.mxu0 0
  %110 = vmatpush1.bf16.msra.mxu0 0
  %111 = vmatprep.mubr.bf16.mxu0 0
  %112 = vmatmul.mubr.bf16.gmra.mrb[0].mxu0 %v56
  %v113 = vpop.f32.mrb[0].mxu0
  %v114 = vadd.f32 0.0, %v113
  %v115 = vpop.f32.mrb[0].mxu0
  %v116 = vpop.f32.mrb[0].mxu0
  %v117 = vadd.f32 0.0, %v116
  %v118 = vpop.f32.mrb[0].mxu0
  %119 = vmatprep.mubr.bf16.mxu0 0
  %120 = vmatmul.mubr.bf16.gmra.mrb[0].mxu0 %v59
  %v121 = vpop.f32.mrb[0].mxu0
  %v122 = vadd.f32 0.0, %v121
  %v123 = vpop.f32.mrb[0].mxu0
  %v124 = vpop.f32.mrb[0].mxu0
  %v125 = vadd.f32 0.0, %v124
  %v126 = vpop.f32.mrb[0].mxu0
  %127 = vmatprep.mubr.bf16.mxu0 0
  %128 = vmatmul.mubr.bf16.gmra.mrb[0].mxu0 %v62
  %v129 = vpop.f32.mrb[0].mxu0
  %v130 = vadd.f32 0.0, %v129
  %v131 = vpop.f32.mrb[0].mxu0
  %v132 = vpop.f32.mrb[0].mxu0
  %v133 = vadd.f32 0.0, %v132
  %v134 = vpop.f32.mrb[0].mxu0
  %135 = vmatprep.mubr.bf16.mxu0 0
  %136 = vmatmul.mubr.bf16.gmra.mrb[0].mxu0 %v65
  %v137 = vpop.f32.mrb[0].mxu0
  %v138 = vadd.f32 0.0, %v137
  %v139 = vpop.f32.mrb[0].mxu0
  %v140 = vpop.f32.mrb[0].mxu0
  %v141 = vadd.f32 0.0, %v140
  %v142 = vpop.f32.mrb[0].mxu0
  %143 = vmatprep.mubr.bf16.mxu0 0
  %144 = vmatmul.mubr.bf16.gmra.mrb[0].mxu0 %v68
  %v145 = vpop.f32.mrb[0].mxu0
  %v146 = vadd.f32 0.0, %v145
  %v147 = vpop.f32.mrb[0].mxu0
  %v148 = vpop.f32.mrb[0].mxu0
  %v149 = vadd.f32 0.0, %v148
  %v150 = vpop.f32.mrb[0].mxu0
  %151 = vmatprep.mubr.bf16.mxu0 0
  %152 = vmatmul.mubr.bf16.gmra.mrb[0].mxu0 %v71
  %v153 = vpop.f32.mrb[0].mxu0
  %v154 = vadd.f32 0.0, %v153
  %v155 = vpop.f32.mrb[0].mxu0
  %v156 = vpop.f32.mrb[0].mxu0
  %v157 = vadd.f32 0.0, %v156
  %v158 = vpop.f32.mrb[0].mxu0
  %159 = vmatprep.mubr.bf16.mxu0 0
  %160 = vmatmul.mubr.bf16.gmra.mrb[0].mxu0 %v74
  %v161 = vpop.f32.mrb[0].mxu0
  %v162 = vadd.f32 0.0, %v161
  %v163 = vpop.f32.mrb[0].mxu0
  %v164 = vpop.f32.mrb[0].mxu0
  %v165 = vadd.f32 0.0, %v164
  %v166 = vpop.f32.mrb[0].mxu0
  %167 = vmatprep.mubr.bf16.mxu0 0
  %168 = vmatmul.mubr.bf16.gmra.mrb[0].mxu0 %v77
  %v169 = vpop.f32.mrb[0].mxu0
  %v170 = vadd.f32 0.0, %v169
  %v171 = vpop.f32.mrb[0].mxu0
  %v172 = vpop.f32.mrb[0].mxu0
  %v173 = vadd.f32 0.0, %v172
  %v174 = vpop.f32.mrb[0].mxu0
  %175 = vdwg.mxu0
  %176 = vmatprep.subr.bf16.mxu0 0
  %177 = vmatpush1.bf16.msra.mxu0 1065369472
  %178 = vmatprep.subr.bf16.mxu0 0
  %179 = vmatpush1.bf16.msra.mxu0 0
  %180 = vmatprep.subr.bf16.mxu0 0
  %181 = vmatpush1.bf16.msra.mxu0 0
  %182 = vmatprep.subr.bf16.mxu0 0
  %183 = vmatpush1.bf16.msra.mxu0 0
  %184 = vmatprep.subr.bf16.mxu0 0
  %185 = vmatpush1.bf16.msra.mxu0 0
  %186 = vmatprep.subr.bf16.mxu0 0
  %187 = vmatpush1.bf16.msra.mxu0 0
  %188 = vmatprep.subr.bf16.mxu0 0
  %189 = vmatpush1.bf16.msra.mxu0 0
  %190 = vmatprep.subr.bf16.mxu0 0
  %191 = vmatpush1.bf16.msra.mxu0 0
  %192 = vmatprep.subr.bf16.mxu0 0
  %193 = vmatpush1.bf16.msra.mxu0 0
  %194 = vmatprep.subr.bf16.mxu0 0
  %195 = vmatpush1.bf16.msra.mxu0 0
  %196 = vmatprep.subr.bf16.mxu0 0
  %197 = vmatpush1.bf16.msra.mxu0 0
  %198 = vmatprep.subr.bf16.mxu0 0
  %199 = vmatpush1.bf16.msra.mxu0 0
  %200 = vmatprep.subr.bf16.mxu0 0
  %201 = vmatpush1.bf16.msra.mxu0 0
  %202 = vmatprep.subr.bf16.mxu0 0
  %203 = vmatpush1.bf16.msra.mxu0 0
  %204 = vmatprep.subr.bf16.mxu0 0
  %205 = vmatpush1.bf16.msra.mxu0 0
  %206 = vmatprep.subr.bf16.mxu0 0
  %207 = vmatpush1.bf16.msra.mxu0 0
  %208 = vmatprep.mubr.bf16.mxu0 0
  %209 = vmatmul.mubr.bf16.gmra.mrb[0].mxu0 %v56
  %v210 = vpop.f32.mrb[0].mxu0
  %v211 = vadd.f32 0.0, %v210
  %v212 = vpop.f32.mrb[0].mxu0
  %v213 = vpop.f32.mrb[0].mxu0
  %v214 = vadd.f32 0.0, %v213
  %v215 = vpop.f32.mrb[0].mxu0
  %216 = vmatprep.mubr.bf16.mxu0 0
  %217 = vmatmul.mubr.bf16.gmra.mrb[0].mxu0 %v59
  %v218 = vpop.f32.mrb[0].mxu0
  %v219 = vadd.f32 0.0, %v218
  %v220 = vpop.f32.mrb[0].mxu0
  %v221 = vpop.f32.mrb[0].mxu0
  %v222 = vadd.f32 0.0, %v221
  %v223 = vpop.f32.mrb[0].mxu0
  %224 = vmatprep.mubr.bf16.mxu0 0
  %225 = vmatmul.mubr.bf16.gmra.mrb[0].mxu0 %v62
  %v226 = vpop.f32.mrb[0].mxu0
  %v227 = vadd.f32 0.0, %v226
  %v228 = vpop.f32.mrb[0].mxu0
  %v229 = vpop.f32.mrb[0].mxu0
  %v230 = vadd.f32 0.0, %v229
  %v231 = vpop.f32.mrb[0].mxu0
  %232 = vmatprep.mubr.bf16.mxu0 0
  %233 = vmatmul.mubr.bf16.gmra.mrb[0].mxu0 %v65
  %v234 = vpop.f32.mrb[0].mxu0
  %v235 = vadd.f32 0.0, %v234
  %v236 = vpop.f32.mrb[0].mxu0
  %v237 = vpop.f32.mrb[0].mxu0
  %v238 = vadd.f32 0.0, %v237
  %v239 = vpop.f32.mrb[0].mxu0
  %240 = vmatprep.mubr.bf16.mxu0 0
  %241 = vmatmul.mubr.bf16.gmra.mrb[0].mxu0 %v68
  %v242 = vpop.f32.mrb[0].mxu0
  %v243 = vadd.f32 0.0, %v242
  %v244 = vpop.f32.mrb[0].mxu0
  %v245 = vpop.f32.mrb[0].mxu0
  %v246 = vadd.f32 0.0, %v245
  %v247 = vpop.f32.mrb[0].mxu0
  %248 = vmatprep.mubr.bf16.mxu0 0
  %249 = vmatmul.mubr.bf16.gmra.mrb[0].mxu0 %v71
  %v250 = vpop.f32.mrb[0].mxu0
  %v251 = vadd.f32 0.0, %v250
  %v252 = vpop.f32.mrb[0].mxu0
  %v253 = vpop.f32.mrb[0].mxu0
  %v254 = vadd.f32 0.0, %v253
  %v255 = vpop.f32.mrb[0].mxu0
  %256 = vmatprep.mubr.bf16.mxu0 0
  %257 = vmatmul.mubr.bf16.gmra.mrb[0].mxu0 %v74
  %v258 = vpop.f32.mrb[0].mxu0
  %v259 = vadd.f32 0.0, %v258
  %v260 = vpop.f32.mrb[0].mxu0
  %v261 = vpop.f32.mrb[0].mxu0
  %v262 = vadd.f32 0.0, %v261
  %v263 = vpop.f32.mrb[0].mxu0
  %264 = vmatprep.mubr.bf16.mxu0 0
  %265 = vmatmul.mubr.bf16.gmra.mrb[0].mxu0 %v77
  %v266 = vpop.f32.mrb[0].mxu0
  %v267 = vadd.f32 0.0, %v266
  %v268 = vpop.f32.mrb[0].mxu0
  %v269 = vpop.f32.mrb[0].mxu0
  %v270 = vadd.f32 0.0, %v269
  %v271 = vpop.f32.mrb[0].mxu0
  %272 = vdwg.mxu0
  %v273 = vmax.f32 %v211, 1.0
  %v274 = vmax.f32 %v214, 1.0
  %v275 = vmax.f32 %v219, 1.0
  %v276 = vmax.f32 %v222, 1.0
  %v277 = vmax.f32 %v227, 1.0
  %v278 = vmax.f32 %v230, 1.0
  %v279 = vmax.f32 %v235, 1.0
  %v280 = vmax.f32 %v238, 1.0
  %v281 = vmax.f32 %v243, 1.0
  %v282 = vmax.f32 %v246, 1.0
  %v283 = vmax.f32 %v251, 1.0
  %v284 = vmax.f32 %v254, 1.0
  %v285 = vmax.f32 %v259, 1.0
  %v286 = vmax.f32 %v262, 1.0
  %v287 = vmax.f32 %v267, 1.0
  %v288 = vmax.f32 %v270, 1.0
  %v289 = vrcp.pop %v273
  %v290 = vrcp.pop %v274
  %v291 = vrcp.pop %v275
  %v292 = vrcp.pop %v276
  %v293 = vrcp.pop %v277
  %v294 = vrcp.pop %v278
  %v295 = vrcp.pop %v279
  %v296 = vrcp.pop %v280
  %v297 = vrcp.pop %v281
  %v298 = vrcp.pop %v282
  %v299 = vrcp.pop %v283
  %v300 = vrcp.pop %v284
  %v301 = vrcp.pop %v285
  %v302 = vrcp.pop %v286
  %v303 = vrcp.pop %v287
  %v304 = vrcp.pop %v288
  %306 = vset.pattern.permute.xlu0 0
  %307 = vperm.xlu0 %306, %v289
  %v308 = vpop.permute.xlu0 %307
  %311 = vset.pattern.permute.xlu0 0
  %312 = vperm.xlu0 %311, %v290
  %v313 = vpop.permute.xlu0 %312
  %316 = vset.pattern.permute.xlu0 0
  %317 = vperm.xlu0 %316, %v291
  %v318 = vpop.permute.xlu0 %317
  %321 = vset.pattern.permute.xlu0 0
  %322 = vperm.xlu0 %321, %v292
  %v323 = vpop.permute.xlu0 %322
  %326 = vset.pattern.permute.xlu0 0
  %327 = vperm.xlu0 %326, %v293
  %v328 = vpop.permute.xlu0 %327
  %331 = vset.pattern.permute.xlu0 0
  %332 = vperm.xlu0 %331, %v294
  %v333 = vpop.permute.xlu0 %332
  %336 = vset.pattern.permute.xlu0 0
  %337 = vperm.xlu0 %336, %v295
  %v338 = vpop.permute.xlu0 %337
  %341 = vset.pattern.permute.xlu0 0
  %342 = vperm.xlu0 %341, %v296
  %v343 = vpop.permute.xlu0 %342
  %346 = vset.pattern.permute.xlu0 0
  %347 = vperm.xlu0 %346, %v297
  %v348 = vpop.permute.xlu0 %347
  %351 = vset.pattern.permute.xlu0 0
  %352 = vperm.xlu0 %351, %v298
  %v353 = vpop.permute.xlu0 %352
  %356 = vset.pattern.permute.xlu0 0
  %357 = vperm.xlu0 %356, %v299
  %v358 = vpop.permute.xlu0 %357
  %361 = vset.pattern.permute.xlu0 0
  %362 = vperm.xlu0 %361, %v300
  %v363 = vpop.permute.xlu0 %362
  %366 = vset.pattern.permute.xlu0 0
  %367 = vperm.xlu0 %366, %v301
  %v368 = vpop.permute.xlu0 %367
  %371 = vset.pattern.permute.xlu0 0
  %372 = vperm.xlu0 %371, %v302
  %v373 = vpop.permute.xlu0 %372
  %376 = vset.pattern.permute.xlu0 0
  %377 = vperm.xlu0 %376, %v303
  %v378 = vpop.permute.xlu0 %377
  %381 = vset.pattern.permute.xlu0 0
  %382 = vperm.xlu0 %381, %v304
  %v383 = vpop.permute.xlu0 %382
  %v385 = vmul.f32 %v114, %v308
  %v386 = vmul.f32 %v117, %v313
  %v387 = vmul.f32 %v122, %v318
  %v388 = vmul.f32 %v125, %v323
  %v389 = vmul.f32 %v130, %v328
  %v390 = vmul.f32 %v133, %v333
  %v391 = vmul.f32 %v138, %v338
  %v392 = vmul.f32 %v141, %v343
  %v393 = vmul.f32 %v146, %v348
  %v394 = vmul.f32 %v149, %v353
  %v395 = vmul.f32 %v154, %v358
  %v396 = vmul.f32 %v157, %v363
  %v397 = vmul.f32 %v162, %v368
  %v398 = vmul.f32 %v165, %v373
  %v399 = vmul.f32 %v170, %v378
  %v400 = vmul.f32 %v173, %v383
  %v401 = vld [vmem:[%s2] sm:$0xf]
  %v402 = vld [vmem:[%s2 + $0x4] sm:$0xf]
  %v403 = vld [vmem:[%s2 + $0x8] sm:$0xf]
  %v404 = vld [vmem:[%s2 + $0xc] sm:$0xf]
  %v405 = vld [vmem:[%s2 + $0x10] sm:$0xf]
  %v406 = vld [vmem:[%s2 + $0x14] sm:$0xf]
  %v407 = vld [vmem:[%s2 + $0x18] sm:$0xf]
  %v408 = vld [vmem:[%s2 + $0x1c] sm:$0xf]
  %v409 = vld [vmem:[%s2 + $0x20] sm:$0xf]
  %v410 = vld [vmem:[%s2 + $0x24] sm:$0xf]
  %v411 = vld [vmem:[%s2 + $0x28] sm:$0xf]
  %v412 = vld [vmem:[%s2 + $0x2c] sm:$0xf]
  %v413 = vld [vmem:[%s2 + $0x30] sm:$0xf]
  %v414 = vld [vmem:[%s2 + $0x34] sm:$0xf]
  %v415 = vld [vmem:[%s2 + $0x38] sm:$0xf]
  %v416 = vld [vmem:[%s2 + $0x3c] sm:$0xf]
  %v417 = vld [vmem:[%s3] sm:$0xf]
  %v418 = vld [vmem:[%s3 + $0x4] sm:$0xf]
  %v419 = vld [vmem:[%s3 + $0x8] sm:$0xf]
  %v420 = vld [vmem:[%s3 + $0xc] sm:$0xf]
  %v421 = vld [vmem:[%s3 + $0x10] sm:$0xf]
  %v422 = vld [vmem:[%s3 + $0x14] sm:$0xf]
  %v423 = vld [vmem:[%s3 + $0x18] sm:$0xf]
  %v424 = vld [vmem:[%s3 + $0x1c] sm:$0xf]
  %v425 = vld [vmem:[%s3 + $0x20] sm:$0xf]
  %v426 = vld [vmem:[%s3 + $0x24] sm:$0xf]
  %v427 = vld [vmem:[%s3 + $0x28] sm:$0xf]
  %v428 = vld [vmem:[%s3 + $0x2c] sm:$0xf]
  %v429 = vld [vmem:[%s3 + $0x30] sm:$0xf]
  %v430 = vld [vmem:[%s3 + $0x34] sm:$0xf]
  %v431 = vld [vmem:[%s3 + $0x38] sm:$0xf]
  %v432 = vld [vmem:[%s3 + $0x3c] sm:$0xf]
  %v449 = vunpack.c.l.b16 %v401
  %v450 = vunpack.c.l.b16 %v402
  %v451 = vunpack.c.l.b16 %v403
  %v452 = vunpack.c.l.b16 %v404
  %v453 = vunpack.c.l.b16 %v405
  %v454 = vunpack.c.l.b16 %v406
  %v455 = vunpack.c.l.b16 %v407
  %v456 = vunpack.c.l.b16 %v408
  %v457 = vunpack.c.l.b16 %v409
  %v458 = vunpack.c.l.b16 %v410
  %v459 = vunpack.c.l.b16 %v411
  %v460 = vunpack.c.l.b16 %v412
  %v461 = vunpack.c.l.b16 %v413
  %v462 = vunpack.c.l.b16 %v414
  %v463 = vunpack.c.l.b16 %v415
  %v464 = vunpack.c.l.b16 %v416
  %v465 = vpack.c.b16 %v450, %v449
  %v466 = vpack.c.b16 %v452, %v451
  %v467 = vpack.c.b16 %v454, %v453
  %v468 = vpack.c.b16 %v456, %v455
  %v469 = vpack.c.b16 %v458, %v457
  %v470 = vpack.c.b16 %v460, %v459
  %v471 = vpack.c.b16 %v462, %v461
  %v472 = vpack.c.b16 %v464, %v463
  %v497 = vunpack.c.l.b16 %v417
  %v498 = vunpack.c.l.b16 %v418
  %v499 = vunpack.c.l.b16 %v419
  %v500 = vunpack.c.l.b16 %v420
  %v501 = vunpack.c.l.b16 %v421
  %v502 = vunpack.c.l.b16 %v422
  %v503 = vunpack.c.l.b16 %v423
  %v504 = vunpack.c.l.b16 %v424
  %v505 = vunpack.c.l.b16 %v425
  %v506 = vunpack.c.l.b16 %v426
  %v507 = vunpack.c.l.b16 %v427
  %v508 = vunpack.c.l.b16 %v428
  %v509 = vunpack.c.l.b16 %v429
  %v510 = vunpack.c.l.b16 %v430
  %v511 = vunpack.c.l.b16 %v431
  %v512 = vunpack.c.l.b16 %v432
  %v513 = vpack.c.b16 %v498, %v497
  %v514 = vpack.c.b16 %v500, %v499
  %v515 = vpack.c.b16 %v502, %v501
  %v516 = vpack.c.b16 %v504, %v503
  %v517 = vpack.c.b16 %v506, %v505
  %v518 = vpack.c.b16 %v508, %v507
  %v519 = vpack.c.b16 %v510, %v509
  %v520 = vpack.c.b16 %v512, %v511
  %529 = vmatprep.subr.bf16.mxu0 0
  %530 = vmatpush1.bf16.msra.mxu0 %v513
  %531 = vmatprep.subr.bf16.mxu0 0
  %532 = vmatpush1.bf16.msra.mxu0 %v514
  %533 = vmatprep.subr.bf16.mxu0 0
  %534 = vmatpush1.bf16.msra.mxu0 %v515
  %535 = vmatprep.subr.bf16.mxu0 0
  %536 = vmatpush1.bf16.msra.mxu0 %v516
  %537 = vmatprep.subr.bf16.mxu0 0
  %538 = vmatpush1.bf16.msra.mxu0 %v517
  %539 = vmatprep.subr.bf16.mxu0 0
  %540 = vmatpush1.bf16.msra.mxu0 %v518
  %541 = vmatprep.subr.bf16.mxu0 0
  %542 = vmatpush1.bf16.msra.mxu0 %v519
  %543 = vmatprep.subr.bf16.mxu0 0
  %544 = vmatpush1.bf16.msra.mxu0 %v520
  %545 = vmatprep.subr.bf16.mxu0 0
  %546 = vmatpush1.bf16.msra.mxu0 0
  %547 = vmatprep.subr.bf16.mxu0 0
  %548 = vmatpush1.bf16.msra.mxu0 0
  %549 = vmatprep.subr.bf16.mxu0 0
  %550 = vmatpush1.bf16.msra.mxu0 0
  %551 = vmatprep.subr.bf16.mxu0 0
  %552 = vmatpush1.bf16.msra.mxu0 0
  %553 = vmatprep.subr.bf16.mxu0 0
  %554 = vmatpush1.bf16.msra.mxu0 0
  %555 = vmatprep.subr.bf16.mxu0 0
  %556 = vmatpush1.bf16.msra.mxu0 0
  %557 = vmatprep.subr.bf16.mxu0 0
  %558 = vmatpush1.bf16.msra.mxu0 0
  %559 = vmatprep.subr.bf16.mxu0 0
  %560 = vmatpush1.bf16.msra.mxu0 0
  %561 = vmatprep.mubr.bf16.mxu0 0
  %562 = vmatmul.mubr.bf16.gmra.mrb[0].mxu0 %v465
  %v563 = vpop.f32.mrb[0].mxu0
  %v564 = vadd.f32 0.0, %v563
  %v565 = vpop.f32.mrb[0].mxu0
  %v566 = vpop.f32.mrb[0].mxu0
  %v567 = vadd.f32 0.0, %v566
  %v568 = vpop.f32.mrb[0].mxu0
  %569 = vmatprep.mubr.bf16.mxu0 0
  %570 = vmatmul.mubr.bf16.gmra.mrb[0].mxu0 %v466
  %v571 = vpop.f32.mrb[0].mxu0
  %v572 = vadd.f32 0.0, %v571
  %v573 = vpop.f32.mrb[0].mxu0
  %v574 = vpop.f32.mrb[0].mxu0
  %v575 = vadd.f32 0.0, %v574
  %v576 = vpop.f32.mrb[0].mxu0
  %577 = vmatprep.mubr.bf16.mxu0 0
  %578 = vmatmul.mubr.bf16.gmra.mrb[0].mxu0 %v467
  %v579 = vpop.f32.mrb[0].mxu0
  %v580 = vadd.f32 0.0, %v579
  %v581 = vpop.f32.mrb[0].mxu0
  %v582 = vpop.f32.mrb[0].mxu0
  %v583 = vadd.f32 0.0, %v582
  %v584 = vpop.f32.mrb[0].mxu0
  %585 = vmatprep.mubr.bf16.mxu0 0
  %586 = vmatmul.mubr.bf16.gmra.mrb[0].mxu0 %v468
  %v587 = vpop.f32.mrb[0].mxu0
  %v588 = vadd.f32 0.0, %v587
  %v589 = vpop.f32.mrb[0].mxu0
  %v590 = vpop.f32.mrb[0].mxu0
  %v591 = vadd.f32 0.0, %v590
  %v592 = vpop.f32.mrb[0].mxu0
  %593 = vmatprep.mubr.bf16.mxu0 0
  %594 = vmatmul.mubr.bf16.gmra.mrb[0].mxu0 %v469
  %v595 = vpop.f32.mrb[0].mxu0
  %v596 = vadd.f32 0.0, %v595
  %v597 = vpop.f32.mrb[0].mxu0
  %v598 = vpop.f32.mrb[0].mxu0
  %v599 = vadd.f32 0.0, %v598
  %v600 = vpop.f32.mrb[0].mxu0
  %601 = vmatprep.mubr.bf16.mxu0 0
  %602 = vmatmul.mubr.bf16.gmra.mrb[0].mxu0 %v470
  %v603 = vpop.f32.mrb[0].mxu0
  %v604 = vadd.f32 0.0, %v603
  %v605 = vpop.f32.mrb[0].mxu0
  %v606 = vpop.f32.mrb[0].mxu0
  %v607 = vadd.f32 0.0, %v606
  %v608 = vpop.f32.mrb[0].mxu0
  %609 = vmatprep.mubr.bf16.mxu0 0
  %610 = vmatmul.mubr.bf16.gmra.mrb[0].mxu0 %v471
  %v611 = vpop.f32.mrb[0].mxu0
  %v612 = vadd.f32 0.0, %v611
  %v613 = vpop.f32.mrb[0].mxu0
  %v614 = vpop.f32.mrb[0].mxu0
  %v615 = vadd.f32 0.0, %v614
  %v616 = vpop.f32.mrb[0].mxu0
  %617 = vmatprep.mubr.bf16.mxu0 0
  %618 = vmatmul.mubr.bf16.gmra.mrb[0].mxu0 %v472
  %v619 = vpop.f32.mrb[0].mxu0
  %v620 = vadd.f32 0.0, %v619
  %v621 = vpop.f32.mrb[0].mxu0
  %v622 = vpop.f32.mrb[0].mxu0
  %v623 = vadd.f32 0.0, %v622
  %v624 = vpop.f32.mrb[0].mxu0
  %625 = vdwg.mxu0
  %v626 = vadd.f32 %v385, %v564
  %v627 = vadd.f32 %v386, %v567
  %v628 = vadd.f32 %v387, %v572
  %v629 = vadd.f32 %v388, %v575
  %v630 = vadd.f32 %v389, %v580
  %v631 = vadd.f32 %v390, %v583
  %v632 = vadd.f32 %v391, %v588
  %v633 = vadd.f32 %v392, %v591
  %v634 = vadd.f32 %v393, %v596
  %v635 = vadd.f32 %v394, %v599
  %v636 = vadd.f32 %v395, %v604
  %v637 = vadd.f32 %v396, %v607
  %v638 = vadd.f32 %v397, %v612
  %v639 = vadd.f32 %v398, %v615
  %v640 = vadd.f32 %v399, %v620
  %v641 = vadd.f32 %v400, %v623
  %v642 = vld [vmem:[%s4] sm:$0x1]
  %v644 = vlaneseq
  %v645 = vshrl.u32 %v644, 7
  %v646 = vsub.s32 0, %v645
  %v647 = vrot.slane %v642, %v646
  %v649 = vadd.f32 %v626, %v647
  %v650 = vadd.f32 %v627, %v647
  %v651 = vadd.f32 %v628, %v647
  %v652 = vadd.f32 %v629, %v647
  %v653 = vadd.f32 %v630, %v647
  %v654 = vadd.f32 %v631, %v647
  %v655 = vadd.f32 %v632, %v647
  %v656 = vadd.f32 %v633, %v647
  %v657 = vadd.f32 %v634, %v647
  %v658 = vadd.f32 %v635, %v647
  %v659 = vadd.f32 %v636, %v647
  %v660 = vadd.f32 %v637, %v647
  %v661 = vadd.f32 %v638, %v647
  %v662 = vadd.f32 %v639, %v647
  %v663 = vadd.f32 %v640, %v647
  %v664 = vadd.f32 %v641, %v647
  %665 = vst [vmem:[%s5] sm:$0xff] %v649
  %666 = vst [vmem:[%s5 + $0x8] sm:$0xff] %v650
  %667 = vst [vmem:[%s5 + $0x10] sm:$0xff] %v651
  %668 = vst [vmem:[%s5 + $0x18] sm:$0xff] %v652
  %669 = vst [vmem:[%s5 + $0x20] sm:$0xff] %v653
  %670 = vst [vmem:[%s5 + $0x28] sm:$0xff] %v654
  %671 = vst [vmem:[%s5 + $0x30] sm:$0xff] %v655
  %672 = vst [vmem:[%s5 + $0x38] sm:$0xff] %v656
  %673 = vst [vmem:[%s5 + $0x40] sm:$0xff] %v657
  %674 = vst [vmem:[%s5 + $0x48] sm:$0xff] %v658
  %675 = vst [vmem:[%s5 + $0x50] sm:$0xff] %v659
  %676 = vst [vmem:[%s5 + $0x58] sm:$0xff] %v660
  %677 = vst [vmem:[%s5 + $0x60] sm:$0xff] %v661
  %678 = vst [vmem:[%s5 + $0x68] sm:$0xff] %v662
  %679 = vst [vmem:[%s5 + $0x70] sm:$0xff] %v663
  %680 = vst [vmem:[%s5 + $0x78] sm:$0xff] %v664
  // Predicated region
  $region22: #{graphsage_forward.15} parent=0 // pred_check
    _
  $region23: #{graphsage_forward.15} parent=0 // pred_check_branch
    %682 = sbr.rel (0) target = $region25
  $region24: #{graphsage_forward.15} parent=0 // pred_region
    _
  $region25: #{graphsage_forward.15} parent=0 // pred_fallthru
    _
  // Predicated region
  $region26: #{graphsage_forward.15} parent=0 // pred_check
    _
  $region27: #{graphsage_forward.15} parent=0 // pred_check_branch
    %684 = sbr.rel (0) target = $region29
  $region28: #{graphsage_forward.15} parent=0 // pred_region
    _
  $region29: #{graphsage_forward.15} parent=0 // pred_fallthru
    _

// kernel: graphsage_forward.13
$region0: #{graphsage_forward.13}
  #allocation0 [shape = 'u32[]', space=smem, size = 0x4, offset = 0x4, fixed_abs, tag = 'smem constant byte address 0x4 - core index']
  #allocation1 [shape = 'u32[144,128]{1,0:T(1,128)}', space=vmem, size = 0x12000, scoped, tag = 'internal scratch']
  %s0 = inlined_call_operand.vmem [shape: bf16[16,128], index: 0, kind: input, shape index: {}]
  %s1 = inlined_call_operand.vmem [shape: bf16[128,128], index: 1, kind: input, shape index: {}]
  %s2 = inlined_call_operand.vmem [shape: bf16[16,128], index: 2, kind: input, shape index: {}]
  %s3 = inlined_call_operand.vmem [shape: bf16[128,128], index: 3, kind: input, shape index: {}]
  %s4 = inlined_call_operand.vmem [shape: f32[1,128], index: 4, kind: input, shape index: {}]
  %s5 = inlined_call_operand.hbm [shape: f32[16,128], index: 5, kind: output, shape index: {}]
  %s6 = sld [smem:[#allocation0]]
  $region30: #{graphsage_forward.13} parent=0
    _
  %s8 = ssub.s32 1, %s6
  %s9 = scalar_select 0, %s8, %s6
  $region1: #{graphsage_forward.13} parent=0
    #allocation2 [shape = 'u8[8192]{0}', space=vmem, size = 0x2000, scoped, tag = 'output window, operand 0, single buffered']
    #allocation3 [shape = 's32[1]{0}', space=sflag, size = 0x4, scoped, tag = 'scoped memory for graphsage_forward.13']
    %10 = vsyncpa [#allocation3], 0
    // Predicated region
    $region2: #{graphsage_forward.13} parent=1 // pred_check
      _
    $region3: #{graphsage_forward.13} parent=1 // pred_check_branch
      %12 = sbr.rel (0) target = $region5
    $region4: #{graphsage_forward.13} parent=1 // pred_region
      _
    $region5: #{graphsage_forward.13} parent=1 // pred_fallthru
      _
    // Predicated region
    $region6: #{graphsage_forward.13} parent=1 // pred_check
      _
    $region7: #{graphsage_forward.13} parent=1 // pred_check_branch
      %14 = sbr.rel (0) target = $region9
    $region8: #{graphsage_forward.13} parent=1 // pred_region
      _
    $region9: #{graphsage_forward.13} parent=1 // pred_fallthru
      _
    // Predicated region
    $region10: #{graphsage_forward.13} parent=1 // pred_check
      _
    $region11: #{graphsage_forward.13} parent=1 // pred_check_branch
      %16 = sbr.rel (0) target = $region13
    $region12: #{graphsage_forward.13} parent=1 // pred_region
      _
    $region13: #{graphsage_forward.13} parent=1 // pred_fallthru
      _
    // Predicated region
    $region14: #{graphsage_forward.13} parent=1 // pred_check
      _
    $region15: #{graphsage_forward.13} parent=1 // pred_check_branch
      %18 = sbr.rel (0) target = $region17
    $region16: #{graphsage_forward.13} parent=1 // pred_region
      _
    $region17: #{graphsage_forward.13} parent=1 // pred_fallthru
      _
    // Predicated region
    $region18: #{graphsage_forward.13} parent=1 // pred_check
      _
    $region19: #{graphsage_forward.13} parent=1 // pred_check_branch
      %20 = sbr.rel (0) target = $region21
    $region20: #{graphsage_forward.13} parent=1 // pred_region
      _
    $region21: #{graphsage_forward.13} parent=1 // pred_fallthru
      _
    %v23 = vld [vmem:[%s0] sm:$0xf]
    %v24 = vld [vmem:[%s0 + $0x4] sm:$0xf]
    %v25 = vld [vmem:[%s1] sm:$0xf]
    %v26 = vld [vmem:[%s1 + $0x4] sm:$0xf]
    %v27 = vld [vmem:[%s1 + $0x8] sm:$0xf]
    %v28 = vld [vmem:[%s1 + $0xc] sm:$0xf]
    %v29 = vld [vmem:[%s1 + $0x10] sm:$0xf]
    %v30 = vld [vmem:[%s1 + $0x14] sm:$0xf]
    %v31 = vld [vmem:[%s1 + $0x18] sm:$0xf]
    %v32 = vld [vmem:[%s1 + $0x1c] sm:$0xf]
    %v33 = vld [vmem:[%s1 + $0x20] sm:$0xf]
    %v34 = vld [vmem:[%s1 + $0x24] sm:$0xf]
    %v35 = vld [vmem:[%s1 + $0x28] sm:$0xf]
    %v36 = vld [vmem:[%s1 + $0x2c] sm:$0xf]
    %v37 = vld [vmem:[%s1 + $0x30] sm:$0xf]
    %v38 = vld [vmem:[%s1 + $0x34] sm:$0xf]
    %v39 = vld [vmem:[%s1 + $0x38] sm:$0xf]
    %v40 = vld [vmem:[%s1 + $0x3c] sm:$0xf]
    %v43 = vunpack.c.l.b16 %v23
    %v44 = vunpack.c.l.b16 %v24
    %v45 = vpack.c.b16 %v44, %v43
    %v63 = vunpack.c.l.b16 %v25
    %v64 = vunpack.c.l.b16 %v26
    %v65 = vunpack.c.l.b16 %v27
    %v66 = vunpack.c.l.b16 %v28
    %v67 = vunpack.c.l.b16 %v29
    %v68 = vunpack.c.l.b16 %v30
    %v69 = vunpack.c.l.b16 %v31
    %v70 = vunpack.c.l.b16 %v32
    %v71 = vunpack.c.l.b16 %v33
    %v72 = vunpack.c.l.b16 %v34
    %v73 = vunpack.c.l.b16 %v35
    %v74 = vunpack.c.l.b16 %v36
    %v75 = vunpack.c.l.b16 %v37
    %v76 = vunpack.c.l.b16 %v38
    %v77 = vunpack.c.l.b16 %v39
    %v78 = vunpack.c.l.b16 %v40
    %v79 = vpack.c.b16 %v64, %v63
    %v80 = vpack.c.b16 %v66, %v65
    %v81 = vpack.c.b16 %v68, %v67
    %v82 = vpack.c.b16 %v70, %v69
    %v83 = vpack.c.b16 %v72, %v71
    %v84 = vpack.c.b16 %v74, %v73
    %v85 = vpack.c.b16 %v76, %v75
    %v86 = vpack.c.b16 %v78, %v77
    %95 = vmatprep.subr.bf16.mxu0 0
    %96 = vmatpush1.bf16.msra.mxu0 %v79
    %97 = vmatprep.subr.bf16.mxu0 0
    %98 = vmatpush1.bf16.msra.mxu0 %v80
    %99 = vmatprep.subr.bf16.mxu0 0
    %100 = vmatpush1.bf16.msra.mxu0 %v81
    %101 = vmatprep.subr.bf16.mxu0 0
    %102 = vmatpush1.bf16.msra.mxu0 %v82
    %103 = vmatprep.subr.bf16.mxu0 0
    %104 = vmatpush1.bf16.msra.mxu0 %v83
    %105 = vmatprep.subr.bf16.mxu0 0
    %106 = vmatpush1.bf16.msra.mxu0 %v84
    %107 = vmatprep.subr.bf16.mxu0 0
    %108 = vmatpush1.bf16.msra.mxu0 %v85
    %109 = vmatprep.subr.bf16.mxu0 0
    %110 = vmatpush1.bf16.msra.mxu0 %v86
    %111 = vmatprep.subr.bf16.mxu0 0
    %112 = vmatpush1.bf16.msra.mxu0 0
    %113 = vmatprep.subr.bf16.mxu0 0
    %114 = vmatpush1.bf16.msra.mxu0 0
    %115 = vmatprep.subr.bf16.mxu0 0
    %116 = vmatpush1.bf16.msra.mxu0 0
    %117 = vmatprep.subr.bf16.mxu0 0
    %118 = vmatpush1.bf16.msra.mxu0 0
    %119 = vmatprep.subr.bf16.mxu0 0
    %120 = vmatpush1.bf16.msra.mxu0 0
    %121 = vmatprep.subr.bf16.mxu0 0
    %122 = vmatpush1.bf16.msra.mxu0 0
    %123 = vmatprep.subr.bf16.mxu0 0
    %124 = vmatpush1.bf16.msra.mxu0 0
    %125 = vmatprep.subr.bf16.mxu0 0
    %126 = vmatpush1.bf16.msra.mxu0 0
    %127 = vmatprep.mubr.bf16.mxu0 0
    %128 = vmatmul.mubr.bf16.gmra.mrb[0].mxu0 %v45
    %v129 = vpop.f32.mrb[0].mxu0
    %v130 = vadd.f32 0.0, %v129
    %v131 = vpop.f32.mrb[0].mxu0
    %v132 = vpop.f32.mrb[0].mxu0
    %v133 = vadd.f32 0.0, %v132
    %v134 = vpop.f32.mrb[0].mxu0
    %135 = vdwg.mxu0
    %136 = vmatprep.subr.bf16.mxu0 0
    %137 = vmatpush1.bf16.msra.mxu0 1065369472
    %138 = vmatprep.subr.bf16.mxu0 0
    %139 = vmatpush1.bf16.msra.mxu0 1065369472
    %140 = vmatprep.subr.bf16.mxu0 0
    %141 = vmatpush1.bf16.msra.mxu0 1065369472
    %142 = vmatprep.subr.bf16.mxu0 0
    %143 = vmatpush1.bf16.msra.mxu0 1065369472
    %144 = vmatprep.subr.bf16.mxu0 0
    %145 = vmatpush1.bf16.msra.mxu0 1065369472
    %146 = vmatprep.subr.bf16.mxu0 0
    %147 = vmatpush1.bf16.msra.mxu0 1065369472
    %148 = vmatprep.subr.bf16.mxu0 0
    %149 = vmatpush1.bf16.msra.mxu0 1065369472
    %150 = vmatprep.subr.bf16.mxu0 0
    %151 = vmatpush1.bf16.msra.mxu0 1065369472
    %152 = vmatprep.subr.bf16.mxu0 0
    %153 = vmatpush1.bf16.msra.mxu0 0
    %154 = vmatprep.subr.bf16.mxu0 0
    %155 = vmatpush1.bf16.msra.mxu0 0
    %156 = vmatprep.subr.bf16.mxu0 0
    %157 = vmatpush1.bf16.msra.mxu0 0
    %158 = vmatprep.subr.bf16.mxu0 0
    %159 = vmatpush1.bf16.msra.mxu0 0
    %160 = vmatprep.subr.bf16.mxu0 0
    %161 = vmatpush1.bf16.msra.mxu0 0
    %162 = vmatprep.subr.bf16.mxu0 0
    %163 = vmatpush1.bf16.msra.mxu0 0
    %164 = vmatprep.subr.bf16.mxu0 0
    %165 = vmatpush1.bf16.msra.mxu0 0
    %166 = vmatprep.subr.bf16.mxu0 0
    %167 = vmatpush1.bf16.msra.mxu0 0
    %168 = vmatprep.mubr.bf16.mxu0 0
    %169 = vmatmul.mubr.bf16.gmra.mrb[0].mxu0 %v45
    %v170 = vpop.f32.mrb[0].mxu0
    %v171 = vadd.f32 0.0, %v170
    %v172 = vpop.f32.mrb[0].mxu0
    %v173 = vpop.f32.mrb[0].mxu0
    %v174 = vadd.f32 0.0, %v173
    %v175 = vpop.f32.mrb[0].mxu0
    %176 = vdwg.mxu0
    %v177 = vmax.f32 %v171, 1.0
    %v178 = vmax.f32 %v174, 1.0
    %v179 = vrcp.pop %v177
    %v180 = vrcp.pop %v178
    %182 = vset.pattern.permute.xlu0 0
    %183 = vperm.xlu0 %182, %v179
    %v184 = vpop.permute.xlu0 %183
    %187 = vset.pattern.permute.xlu0 0
    %188 = vperm.xlu0 %187, %v180
    %v189 = vpop.permute.xlu0 %188
    %v191 = vmul.f32 %v130, %v184
    %v192 = vmul.f32 %v133, %v189
    %v193 = vld [vmem:[%s2] sm:$0xf]
    %v194 = vld [vmem:[%s2 + $0x4] sm:$0xf]
    %v195 = vld [vmem:[%s3] sm:$0xf]
    %v196 = vld [vmem:[%s3 + $0x4] sm:$0xf]
    %v197 = vld [vmem:[%s3 + $0x8] sm:$0xf]
    %v198 = vld [vmem:[%s3 + $0xc] sm:$0xf]
    %v199 = vld [vmem:[%s3 + $0x10] sm:$0xf]
    %v200 = vld [vmem:[%s3 + $0x14] sm:$0xf]
    %v201 = vld [vmem:[%s3 + $0x18] sm:$0xf]
    %v202 = vld [vmem:[%s3 + $0x1c] sm:$0xf]
    %v203 = vld [vmem:[%s3 + $0x20] sm:$0xf]
    %v204 = vld [vmem:[%s3 + $0x24] sm:$0xf]
    %v205 = vld [vmem:[%s3 + $0x28] sm:$0xf]
    %v206 = vld [vmem:[%s3 + $0x2c] sm:$0xf]
    %v207 = vld [vmem:[%s3 + $0x30] sm:$0xf]
    %v208 = vld [vmem:[%s3 + $0x34] sm:$0xf]
    %v209 = vld [vmem:[%s3 + $0x38] sm:$0xf]
    %v210 = vld [vmem:[%s3 + $0x3c] sm:$0xf]
    %v213 = vunpack.c.l.b16 %v193
    %v214 = vunpack.c.l.b16 %v194
    %v215 = vpack.c.b16 %v214, %v213
    %v233 = vunpack.c.l.b16 %v195
    %v234 = vunpack.c.l.b16 %v196
    %v235 = vunpack.c.l.b16 %v197
    %v236 = vunpack.c.l.b16 %v198
    %v237 = vunpack.c.l.b16 %v199
    %v238 = vunpack.c.l.b16 %v200
    %v239 = vunpack.c.l.b16 %v201
    %v240 = vunpack.c.l.b16 %v202
    %v241 = vunpack.c.l.b16 %v203
    %v242 = vunpack.c.l.b16 %v204
    %v243 = vunpack.c.l.b16 %v205
    %v244 = vunpack.c.l.b16 %v206
    %v245 = vunpack.c.l.b16 %v207
    %v246 = vunpack.c.l.b16 %v208
    %v247 = vunpack.c.l.b16 %v209
    %v248 = vunpack.c.l.b16 %v210
    %v249 = vpack.c.b16 %v234, %v233
    %v250 = vpack.c.b16 %v236, %v235
    %v251 = vpack.c.b16 %v238, %v237
    %v252 = vpack.c.b16 %v240, %v239
    %v253 = vpack.c.b16 %v242, %v241
    %v254 = vpack.c.b16 %v244, %v243
    %v255 = vpack.c.b16 %v246, %v245
    %v256 = vpack.c.b16 %v248, %v247
    %265 = vmatprep.subr.bf16.mxu0 0
    %266 = vmatpush1.bf16.msra.mxu0 %v249
    %267 = vmatprep.subr.bf16.mxu0 0
    %268 = vmatpush1.bf16.msra.mxu0 %v250
    %269 = vmatprep.subr.bf16.mxu0 0
    %270 = vmatpush1.bf16.msra.mxu0 %v251
    %271 = vmatprep.subr.bf16.mxu0 0
    %272 = vmatpush1.bf16.msra.mxu0 %v252
    %273 = vmatprep.subr.bf16.mxu0 0
    %274 = vmatpush1.bf16.msra.mxu0 %v253
    %275 = vmatprep.subr.bf16.mxu0 0
    %276 = vmatpush1.bf16.msra.mxu0 %v254
    %277 = vmatprep.subr.bf16.mxu0 0
    %278 = vmatpush1.bf16.msra.mxu0 %v255
    %279 = vmatprep.subr.bf16.mxu0 0
    %280 = vmatpush1.bf16.msra.mxu0 %v256
    %281 = vmatprep.subr.bf16.mxu0 0
    %282 = vmatpush1.bf16.msra.mxu0 0
    %283 = vmatprep.subr.bf16.mxu0 0
    %284 = vmatpush1.bf16.msra.mxu0 0
    %285 = vmatprep.subr.bf16.mxu0 0
    %286 = vmatpush1.bf16.msra.mxu0 0
    %287 = vmatprep.subr.bf16.mxu0 0
    %288 = vmatpush1.bf16.msra.mxu0 0
    %289 = vmatprep.subr.bf16.mxu0 0
    %290 = vmatpush1.bf16.msra.mxu0 0
    %291 = vmatprep.subr.bf16.mxu0 0
    %292 = vmatpush1.bf16.msra.mxu0 0
    %293 = vmatprep.subr.bf16.mxu0 0
    %294 = vmatpush1.bf16.msra.mxu0 0
    %295 = vmatprep.subr.bf16.mxu0 0
    %296 = vmatpush1.bf16.msra.mxu0 0
    %297 = vmatprep.mubr.bf16.mxu0 0
    %298 = vmatmul.mubr.bf16.gmra.mrb[0].mxu0 %v215
    %v299 = vpop.f32.mrb[0].mxu0
    %v300 = vadd.f32 0.0, %v299
    %v301 = vpop.f32.mrb[0].mxu0
    %v302 = vpop.f32.mrb[0].mxu0
    %v303 = vadd.f32 0.0, %v302
    %v304 = vpop.f32.mrb[0].mxu0
    %305 = vdwg.mxu0
    %v306 = vadd.f32 %v191, %v300
    %v307 = vadd.f32 %v192, %v303
    %v308 = vld [vmem:[%s4] sm:$0x1]
    %v310 = vlaneseq
    %v311 = vshrl.u32 %v310, 7
    %v312 = vsub.s32 0, %v311
    %v313 = vrot.slane %v308, %v312
    %v315 = vadd.f32 %v306, %v313
    %v316 = vadd.f32 %v307, %v313
    %317 = vst [vmem:[#allocation2] sm:$0xff] %v315
    %318 = vst [vmem:[#allocation2 + $0x8] sm:$0xff] %v316
    // Predicated region
    $region22: #{graphsage_forward.13} parent=1 // pred_check
      _
    $region23: #{graphsage_forward.13} parent=1 // pred_check_branch
      %320 = sbr.rel (0) target = $region25
    $region24: #{graphsage_forward.13} parent=1 // pred_region
      %s322 = ssub.s32 256, 256
      %323 = vsyncadd [#allocation3], %s322
      %s324 = sshll.u32 [#allocation2], 4
      %s325 = int_to_ptr.vmem [resolvable:$true] %s324
      %330 = dma.vmem_to_hbm [thread:$0]  %s325, 256, %s5, [#allocation3], 128, 128, 8
    $region25: #{graphsage_forward.13} parent=1 // pred_fallthru
      _
    // Predicated region
    $region26: #{graphsage_forward.13} parent=1 // pred_check
      _
    $region27: #{graphsage_forward.13} parent=1 // pred_check_branch
      %332 = sbr.rel (0) target = $region29
    $region28: #{graphsage_forward.13} parent=1 // pred_region
      %333 = dma.done [#allocation3], 256
    $region29: #{graphsage_forward.13} parent=1 // pred_fallthru
      _
    %334 = vsyncpa [#allocation3], 1

</llo_original>
